<compile_context>
chip_gen: v6e
topology: v6e:2x2x1
jax: 0.10.0
libtpu: 0.0.40
codegen_flags: <defaults>
</compile_context>

<pallas_src>
import jax
import jax.numpy as jnp
from jax.experimental import pallas as pl
from jax.experimental.pallas import tpu as pltpu

IN_DIM = 784
HID_DIM = 200          # true LayerNorm / Linear width (PyTorch semantics)
HID_PAD = 256          # lane-dense padded width (2 full f32 vregs)
OUT_DIM = 1
LN_EPS = 1e-5
LRELU_SLOPE = 0.02


def _round_up(n, m):
    return ((n + m - 1) // m) * m


def _choose_tile(bp, tile_b):
    """Pick the batch tile TB: a multiple of 128 that divides bp (so no
    per-tile padding / full-array rewrite), is <= tile_b, and — when bp allows
    — leaves at least 2 grid steps so both v7x TensorCores get work."""
    cap = min(tile_b, bp)
    if bp >= 256:
        cap = min(cap, bp // 2)
    best = 128
    tb = 128
    while tb <= cap:
        if bp % tb == 0:
            best = tb
        tb += 128
    return best


def discriminator_kernel(x_ref, w1_ref, p_ref, s_ref, o_ref):
    # Linear(784 -> 200, zero-padded to 256). The f32 x tile is cast to bf16
    # on the fly (free VPU work under the memory slack); MXU accumulates f32.
    xb = x_ref[...].astype(jnp.bfloat16)
    h = jnp.dot(xb, w1_ref[...], preferred_element_type=jnp.float32)
    h = h + p_ref[0:1, :]                      # b1; padded lanes stay exactly 0

    # LeakyReLU(0.02)  (LeakyReLU(0) == 0, so padded lanes remain 0)
    h = jnp.where(h > 0, h, LRELU_SLOPE * h)

    # LayerNorm statistics over the true 200 features. Padded lanes of h are
    # exactly zero (zero w1 columns + zero b1 pad), so plain lane-sums are
    # unbiased as long as we divide by 200 and use var = E[h^2] - mean^2
    # (pads contribute 0 to both sums).
    inv_n = 1.0 / HID_DIM
    s1 = jnp.sum(h, axis=-1, keepdims=True)
    s2 = jnp.sum(h * h, axis=-1, keepdims=True)
    mean = s1 * inv_n
    var = s2 * inv_n - mean * mean
    rstd = jax.lax.rsqrt(var + LN_EPS)

    # Folded LayerNorm affine + Linear(200 -> 1) + Sigmoid, never materializing
    # the normalized activation:
    #   z = rstd * (sum(h * gw2) - mean * sum(gw2)) + (sum(beta*w2) + b2)
    # where gw2 = gamma * w2 (zero-padded -> padded lanes contribute nothing).
    gw2 = p_ref[1:2, :]
    s3 = jnp.sum(h * gw2, axis=-1, keepdims=True)
    z = rstd * (s3 - mean * s_ref[0]) + s_ref[1]
    o_ref[...] = jax.nn.sigmoid(z)


def _prepare_params(params):
    """Pad hidden dim 200 -> 256, cast the large matmul operand to bf16, fold
    the LayerNorm affine into the 200->1 projection, and pack small params."""
    w1, b1, gamma, beta, w2, b2 = params
    pad = HID_PAD - HID_DIM

    w1p = jnp.pad(w1, ((0, 0), (0, pad))).astype(jnp.bfloat16)      # (784, 256)
    b1p = jnp.pad(b1, ((0, 0), (0, pad)))                           # (1, 256)

    w2_row = w2.reshape(1, HID_DIM)
    gw2 = gamma * w2_row                                            # (1, 200)
    gw2p = jnp.pad(gw2, ((0, 0), (0, pad)))                         # (1, 256)

    row_params = jnp.concatenate([b1p, gw2p], axis=0)               # (2, 256)

    sgw2 = jnp.sum(gw2)
    c0 = jnp.sum(beta * w2_row) + b2.reshape(())
    scalars = jnp.stack([sgw2, c0]).astype(jnp.float32)             # (2,) SMEM
    return w1p, row_params, scalars


def discriminator_forward(x, params, tile_b=2048):
    """Batch-tiled forward. Default tile_b=2048 amortizes per-step overhead;
    the tile is always a divisor of the (minimally) padded batch and, when the
    batch is large enough, is capped so the grid has >=2 steps for v7x."""
    B = x.shape[0]
    w1p, rowp, scal = _prepare_params(params)

    Bp = _round_up(B, 128)
    TB = _choose_tile(Bp, tile_b)

    xk = x
    if Bp != B:
        # Only when B is not a multiple of 128; pads at most 127 zero rows.
        xk = jnp.pad(x, ((0, Bp - B), (0, 0)))

    grid = (Bp // TB,)
    const2d = lambda i: (0, 0)   # weights: same block every step -> stay resident

    out = pl.pallas_call(
        discriminator_kernel,
        out_shape=jax.ShapeDtypeStruct((Bp, OUT_DIM), jnp.float32),
        grid=grid,
        in_specs=[
            pl.BlockSpec((TB, IN_DIM), lambda i: (i, 0)),        # x tile (f32)
            pl.BlockSpec((IN_DIM, HID_PAD), const2d),            # w1 bf16 (resident)
            pl.BlockSpec((2, HID_PAD), const2d),                 # [b1; gamma*w2]
            pl.BlockSpec(memory_space=pltpu.MemorySpace.SMEM),   # [sum(gw2), c0]
        ],
        out_specs=pl.BlockSpec((TB, OUT_DIM), lambda i: (i, 0)),
        compiler_params=pltpu.CompilerParams(
            dimension_semantics=("parallel",),   # lets v7x split batch over 2 TCs
            vmem_limit_bytes=48 << 20,           # safe on v7x (64 MiB physical)
        ),
    )(xk, w1p, rowp, scal)
    return out[:B]


def init_params(key):
    """Deterministic init mimicking PyTorch defaults (uniform +-1/sqrt(fan_in))."""
    k1, k2, k3, k4 = jax.random.split(key, 4)
    bound1 = 1.0 / jnp.sqrt(IN_DIM)
    w1 = jax.random.uniform(k1, (IN_DIM, HID_DIM), jnp.float32, -bound1, bound1)
    b1 = jax.random.uniform(k2, (1, HID_DIM), jnp.float32, -bound1, bound1)
    gamma = jnp.ones((1, HID_DIM), jnp.float32)   # LayerNorm weight
    beta = jnp.zeros((1, HID_DIM), jnp.float32)   # LayerNorm bias
    bound2 = 1.0 / jnp.sqrt(HID_DIM)
    w2 = jax.random.uniform(k3, (HID_DIM, OUT_DIM), jnp.float32, -bound2, bound2)
    b2 = jax.random.uniform(k4, (1, OUT_DIM), jnp.float32, -bound2, bound2)
    return (w1, b1, gamma, beta, w2, b2)


def reference_forward(x, params):
    """Plain-JAX reference with PyTorch semantics. The first matmul uses the
    same bf16 operands as the kernel (intentional precision choice); LayerNorm
    uses the textbook centered formula over the true 200 features."""
    w1, b1, gamma, beta, w2, b2 = params
    h = jnp.dot(x.astype(jnp.bfloat16), w1.astype(jnp.bfloat16),
                preferred_element_type=jnp.float32) + b1
    h = jnp.where(h > 0, h, LRELU_SLOPE * h)
    mean = jnp.mean(h, axis=-1, keepdims=True)
    var = jnp.mean((h - mean) ** 2, axis=-1, keepdims=True)
    hn = (h - mean) * jax.lax.rsqrt(var + LN_EPS) * gamma + beta
    return jax.nn.sigmoid(hn @ w2 + b2)


# TODO(synk): only the forward pass is implemented; Adam/BCELoss/train()
# bookkeeping from the PyTorch module are training-side and not kernels.

if __name__ == "__main__":
    key = jax.random.PRNGKey(0)
    kx, kp = jax.random.split(key)

    B = 256   # small test batch; tile selection gives TB=128 -> 2-step grid
    x = jax.random.uniform(kx, (B, IN_DIM), jnp.float32)  # MNIST-like pixels in [0,1)
    params = init_params(kp)

    out = jax.block_until_ready(discriminator_forward(x, params))
    ref = reference_forward(x, params)

    assert out.shape == (B, OUT_DIM)
    max_err = float(jnp.max(jnp.abs(out - ref)))
    assert jnp.allclose(out, ref, atol=1e-4, rtol=1e-4), (
        f"mismatch vs reference, max abs err = {max_err}")

    print("KERNEL_OK")
</pallas_src>

<mosaic_0001>
module attributes {stable_mosaic.version = 11 : i64} {
  func.func @discriminator_kernel(%arg0: i32, %arg1: memref<128x784xf32, #tpu.memory_space<vmem>>, %arg2: memref<784x256xbf16, #tpu.memory_space<vmem>>, %arg3: memref<2x256xf32, #tpu.memory_space<vmem>>, %arg4: memref<2xf32, #tpu.memory_space<smem>>, %arg5: memref<128x1xf32, #tpu.memory_space<vmem>>) attributes {dimension_semantics = [#tpu.dimension_semantics<parallel>], iteration_bounds = array<i64: 2>, scalar_prefetch = 0 : i64, scratch_operands = 0 : i64, tpu.core_type = #tpu.core_type<tc>, window_params = [{transform_indices = @transform_0, window_bounds = array<i64: 128, 784>}, {pipeline_mode = #tpu.pipeline_mode<synchronous>, transform_indices = @transform_1, window_bounds = array<i64: 784, 256>}, {pipeline_mode = #tpu.pipeline_mode<synchronous>, transform_indices = @transform_2, window_bounds = array<i64: 2, 256>}, {transform_indices = @transform_3, window_bounds = array<i64: 2>}, {transform_indices = @transform_4, window_bounds = array<i64: 128, 1>}]} {
    %c0 = arith.constant 0 : index
    %c0_0 = arith.constant 0 : index
    %0 = vector.load %arg1[%c0, %c0_0] : memref<128x784xf32, #tpu.memory_space<vmem>>, vector<128x784xf32>
    %1 = arith.truncf %0 : vector<128x784xf32> to vector<128x784xbf16>
    %c0_1 = arith.constant 0 : index
    %c0_2 = arith.constant 0 : index
    %2 = vector.load %arg2[%c0_1, %c0_2] : memref<784x256xbf16, #tpu.memory_space<vmem>>, vector<784x256xbf16>
    %cst = arith.constant dense<0.000000e+00> : vector<128x256xf32>
    %3 = tpu.matmul %1, %2, %cst {dimension_numbers = #tpu.dot_dimension_numbers<[1], [0], [0], [1], [0, 0, 1, 1], [], []>} : vector<128x784xbf16>, vector<784x256xbf16>, vector<128x256xf32> -> vector<128x256xf32>
    %c0_3 = arith.constant 0 : index
    %c0_4 = arith.constant 0 : index
    %4 = vector.load %arg3[%c0_3, %c0_4] : memref<2x256xf32, #tpu.memory_space<vmem>>, vector<1x256xf32>
    %5 = vector.broadcast %4 : vector<1x256xf32> to vector<128x256xf32>
    %6 = arith.addf %3, %5 : vector<128x256xf32>
    %cst_5 = arith.constant 0.000000e+00 : f32
    %7 = vector.broadcast %cst_5 : f32 to vector<128x256xf32>
    %8 = arith.cmpf ogt, %6, %7 : vector<128x256xf32>
    %cst_6 = arith.constant 2.000000e-02 : f32
    %9 = vector.broadcast %cst_6 : f32 to vector<128x256xf32>
    %10 = arith.mulf %9, %6 : vector<128x256xf32>
    %11 = arith.select %8, %6, %10 : vector<128x256xi1>, vector<128x256xf32>
    %cst_7 = arith.constant dense<0.000000e+00> : vector<128xf32>
    %12 = vector.multi_reduction <add>, %11, %cst_7 [1] : vector<128x256xf32> to vector<128xf32>
    %13 = vector.shape_cast %12 : vector<128xf32> to vector<128x1xf32>
    %14 = arith.mulf %11, %11 : vector<128x256xf32>
    %cst_8 = arith.constant dense<0.000000e+00> : vector<128xf32>
    %15 = vector.multi_reduction <add>, %14, %cst_8 [1] : vector<128x256xf32> to vector<128xf32>
    %16 = vector.shape_cast %15 : vector<128xf32> to vector<128x1xf32>
    %cst_9 = arith.constant 5.000000e-03 : f32
    %17 = vector.broadcast %cst_9 : f32 to vector<128x1xf32>
    %18 = arith.mulf %13, %17 : vector<128x1xf32>
    %cst_10 = arith.constant 5.000000e-03 : f32
    %19 = vector.broadcast %cst_10 : f32 to vector<128x1xf32>
    %20 = arith.mulf %16, %19 : vector<128x1xf32>
    %21 = arith.mulf %18, %18 : vector<128x1xf32>
    %22 = arith.subf %20, %21 : vector<128x1xf32>
    %cst_11 = arith.constant 9.99999974E-6 : f32
    %23 = vector.broadcast %cst_11 : f32 to vector<128x1xf32>
    %24 = arith.addf %22, %23 : vector<128x1xf32>
    %25 = math.rsqrt %24 : vector<128x1xf32>
    %c1 = arith.constant 1 : index
    %c0_12 = arith.constant 0 : index
    %26 = vector.load %arg3[%c1, %c0_12] : memref<2x256xf32, #tpu.memory_space<vmem>>, vector<1x256xf32>
    %27 = vector.broadcast %26 : vector<1x256xf32> to vector<128x256xf32>
    %28 = arith.mulf %11, %27 : vector<128x256xf32>
    %cst_13 = arith.constant dense<0.000000e+00> : vector<128xf32>
    %29 = vector.multi_reduction <add>, %28, %cst_13 [1] : vector<128x256xf32> to vector<128xf32>
    %30 = vector.shape_cast %29 : vector<128xf32> to vector<128x1xf32>
    %c0_14 = arith.constant 0 : index
    %31 = memref.load %arg4[%c0_14] : memref<2xf32, #tpu.memory_space<smem>>
    %32 = vector.broadcast %31 : f32 to vector<128x1xf32>
    %33 = arith.mulf %18, %32 : vector<128x1xf32>
    %34 = arith.subf %30, %33 : vector<128x1xf32>
    %35 = arith.mulf %25, %34 : vector<128x1xf32>
    %c1_15 = arith.constant 1 : index
    %36 = memref.load %arg4[%c1_15] : memref<2xf32, #tpu.memory_space<smem>>
    %37 = vector.broadcast %36 : f32 to vector<128x1xf32>
    %38 = arith.addf %35, %37 : vector<128x1xf32>
    %39 = arith.negf %38 : vector<128x1xf32>
    %40 = math.exp %39 : vector<128x1xf32>
    %cst_16 = arith.constant 1.000000e+00 : f32
    %41 = vector.broadcast %cst_16 : f32 to vector<128x1xf32>
    %42 = arith.addf %41, %40 : vector<128x1xf32>
    %43 = arith.divf %41, %42 : vector<128x1xf32>
    %c0_17 = arith.constant 0 : index
    %c0_18 = arith.constant 0 : index
    %44 = vector.load %arg5[%c0_17, %c0_18] : memref<128x1xf32, #tpu.memory_space<vmem>>, vector<128x1xf32>
    tpu.vector_store %arg5[%c0_17, %c0_18], %43 {strides = array<i32>} : memref<128x1xf32, #tpu.memory_space<vmem>>, vector<128x1xf32>,
    return
  }
  func.func @transform_0(%arg0: i32) -> (i32, i32) {
    %c0_i32 = arith.constant 0 : i32
    %c0_i32_0 = arith.constant 0 : i32
    return %arg0, %c0_i32 : i32, i32
  }
  func.func @transform_1(%arg0: i32) -> (i32, i32) {
    %c0_i32 = arith.constant 0 : i32
    %c0_i32_0 = arith.constant 0 : i32
    %c0_i32_1 = arith.constant 0 : i32
    return %c0_i32, %c0_i32_0 : i32, i32
  }
  func.func @transform_2(%arg0: i32) -> (i32, i32) {
    %c0_i32 = arith.constant 0 : i32
    %c0_i32_0 = arith.constant 0 : i32
    %c0_i32_1 = arith.constant 0 : i32
    return %c0_i32, %c0_i32_0 : i32, i32
  }
  func.func @transform_3(%arg0: i32) -> i32 {
    %c0_i32 = arith.constant 0 : i32
    %c0_i32_0 = arith.constant 0 : i32
    return %c0_i32 : i32
  }
  func.func @transform_4(%arg0: i32) -> (i32, i32) {
    %c0_i32 = arith.constant 0 : i32
    %c0_i32_0 = arith.constant 0 : i32
    return %arg0, %c0_i32 : i32, i32
  }
}

</mosaic_0001>

<llo_original>
// kernel: tpu_custom_call.1
$region0: #{tpu_custom_call.1}
  #allocation0 [shape = 'u32[]', space=smem, size = 0x4, offset = 0x4, fixed_abs, tag = 'smem constant byte address 0x4 - core index']
  #allocation1 [shape = 'u32[144,128]{1,0:T(1,128)}', space=vmem, size = 0x12000, scoped, tag = 'internal scratch']
  %s0 = inlined_call_operand.vmem [shape: f32[256,784], index: 0, kind: input, shape index: {}]
  %s1 = inlined_call_operand.vmem [shape: bf16[784,256], index: 1, kind: input, shape index: {}]
  %s2 = inlined_call_operand.vmem [shape: f32[2,256], index: 2, kind: input, shape index: {}]
  %s3 = inlined_call_operand.vmem [shape: f32[2], index: 3, kind: input, shape index: {}]
  %s4 = inlined_call_operand.vmem [shape: f32[256,1], index: 4, kind: output, shape index: {}]
  %s5 = sld [smem:[#allocation0]]
  $region53: #{tpu_custom_call.1} parent=0
    _
  %s7 = ssub.s32 1, %s5
  %s8 = scalar_select 0, %s7, %s5
  $region1: #{tpu_custom_call.1} parent=0
    #allocation2 [shape = 'u8[512]{0}', space=smem, size = 0x200, scoped, tag = 'input window, operand 3, single buffered']
    #allocation3 [shape = 's32[2]{0}', space=sflag, size = 0x8, scoped, tag = 'scoped memory for tpu_custom_call.1']
    %9 = vsyncpa [#allocation3], 0
    loop: start=0, step=1, limit=4
    $region2: #{tpu_custom_call.1} parent=1 // loop_pre_header
      _
    $region3: #{tpu_custom_call.1} parent=1 // loop_header
      %s11 = sphi 0, %s15
      %p12 = scmp.ge.s32.totalorder %s11, 4
      %s21 = sphi 0, %s23
      %s24 = sphi 0, %s21
      %s25 = sphi 0, %s24
      %s41 = sphi 0, %s25
      %s45 = sphi 0, %s45
      %s47 = sphi 0, %s45
      %s48 = sphi 0, %s47
      %s62 = sphi 0, %s48
      %s66 = sphi 0, %s66
      %s68 = sphi 0, %s66
      %s69 = sphi 0, %s68
      %s83 = sphi 0, %s69
      %s87 = sphi 0, %s87
      %s89 = sphi 0, %s87
      %s90 = sphi 0, %s89
      %s104 = sphi 0, %s90
      %s110 = sphi 0, %s112
      %s113 = sphi 0, %s110
      %s114 = sphi 0, %s113
      %s130 = sphi 0, %s114
    $region4: #{tpu_custom_call.1} parent=1 // loop_header_branch
      %14 = sbr.rel (%p12) target = $region8
    $region5: #{tpu_custom_call.1} parent=1 // loop_body
      %s16 = ssub.s32 %s11, 1
      %s17 = ssub.s32 %s11, 2
      %s18 = sadd.s32 %s11, 1
      %s19 = ssub.s32 %s11, %s18
      %p20 = scmp.eq.s32.totalorder %s19, 0
      %s22 = sadd.s32 %s21, 1
      %s23 = scalar_select %p20, %s21, %s22
      %p26 = pneg %p20
      %p27 = scmp.eq.s32.totalorder %s11, 1
      %p28 = por %p26, %p27
      %p29 = scmp.ne.s32.totalorder %s21, %s24
      %p30 = scmp.eq.s32.totalorder %s11, 0
      %p31 = por %p29, %p30
      %p32 = scmp.ne.s32.totalorder %s21, %s24
      %p33 = scmp.eq.s32.totalorder %s16, 1
      %p34 = por %p32, %p33
      %p35 = scmp.ne.s32.totalorder %s24, %s25
      %p36 = scmp.eq.s32.totalorder %s16, 0
      %p37 = por %p35, %p36
      %p38 = scmp.ne.s32.totalorder %s24, %s25
      %p39 = scmp.eq.s32.totalorder %s17, 1
      %p40 = por %p38, %p39
      %p42 = scmp.ne.s32.totalorder %s25, %s41
      %p43 = scmp.eq.s32.totalorder %s17, 0
      %p44 = por %p42, %p43
      %s46 = sadd.s32 %s45, 1
      %p49 = scmp.eq.s32.totalorder %s11, 1
      %p50 = scmp.ne.s32.totalorder %s45, %s47
      %p51 = scmp.eq.s32.totalorder %s11, 0
      %p52 = por %p50, %p51
      %p53 = scmp.ne.s32.totalorder %s45, %s47
      %p54 = scmp.eq.s32.totalorder %s16, 1
      %p55 = por %p53, %p54
      %p56 = scmp.ne.s32.totalorder %s47, %s48
      %p57 = scmp.eq.s32.totalorder %s16, 0
      %p58 = por %p56, %p57
      %p59 = scmp.ne.s32.totalorder %s47, %s48
      %p60 = scmp.eq.s32.totalorder %s17, 1
      %p61 = por %p59, %p60
      %p63 = scmp.ne.s32.totalorder %s48, %s62
      %p64 = scmp.eq.s32.totalorder %s17, 0
      %p65 = por %p63, %p64
      %s67 = sadd.s32 %s66, 1
      %p70 = scmp.eq.s32.totalorder %s11, 1
      %p71 = scmp.ne.s32.totalorder %s66, %s68
      %p72 = scmp.eq.s32.totalorder %s11, 0
      %p73 = por %p71, %p72
      %p74 = scmp.ne.s32.totalorder %s66, %s68
      %p75 = scmp.eq.s32.totalorder %s16, 1
      %p76 = por %p74, %p75
      %p77 = scmp.ne.s32.totalorder %s68, %s69
      %p78 = scmp.eq.s32.totalorder %s16, 0
      %p79 = por %p77, %p78
      %p80 = scmp.ne.s32.totalorder %s68, %s69
      %p81 = scmp.eq.s32.totalorder %s17, 1
      %p82 = por %p80, %p81
      %p84 = scmp.ne.s32.totalorder %s69, %s83
      %p85 = scmp.eq.s32.totalorder %s17, 0
      %p86 = por %p84, %p85
      %s88 = sadd.s32 %s87, 1
      %p91 = scmp.eq.s32.totalorder %s11, 1
      %p92 = scmp.ne.s32.totalorder %s87, %s89
      %p93 = scmp.eq.s32.totalorder %s11, 0
      %p94 = por %p92, %p93
      %p95 = scmp.ne.s32.totalorder %s87, %s89
      %p96 = scmp.eq.s32.totalorder %s16, 1
      %p97 = por %p95, %p96
      %p98 = scmp.ne.s32.totalorder %s89, %s90
      %p99 = scmp.eq.s32.totalorder %s16, 0
      %p100 = por %p98, %p99
      %p101 = scmp.ne.s32.totalorder %s89, %s90
      %p102 = scmp.eq.s32.totalorder %s17, 1
      %p103 = por %p101, %p102
      %p105 = scmp.ne.s32.totalorder %s90, %s104
      %p106 = scmp.eq.s32.totalorder %s17, 0
      %p107 = por %p105, %p106
      %s108 = ssub.s32 %s11, %s18
      %p109 = scmp.eq.s32.totalorder %s108, 0
      %s111 = sadd.s32 %s110, 1
      %s112 = scalar_select %p109, %s110, %s111
      %p115 = pneg %p109
      %p116 = scmp.eq.s32.totalorder %s11, 1
      %p117 = por %p115, %p116
      %p118 = scmp.ne.s32.totalorder %s110, %s113
      %p119 = scmp.eq.s32.totalorder %s11, 0
      %p120 = por %p118, %p119
      %p121 = scmp.ne.s32.totalorder %s110, %s113
      %p122 = scmp.eq.s32.totalorder %s16, 1
      %p123 = por %p121, %p122
      %p124 = scmp.ne.s32.totalorder %s113, %s114
      %p125 = scmp.eq.s32.totalorder %s16, 0
      %p126 = por %p124, %p125
      %p127 = scmp.ne.s32.totalorder %s113, %s114
      %p128 = scmp.eq.s32.totalorder %s17, 1
      %p129 = por %p127, %p128
      %p131 = scmp.ne.s32.totalorder %s114, %s130
      %p132 = scmp.eq.s32.totalorder %s17, 0
      %p133 = por %p131, %p132
      %p134 = scmp.le.s32.totalorder 1, %s11
      %p135 = scmp.lt.s32.totalorder %s11, 3
      %p136 = pnand %p134, %p135
      %p137 = pneg %p136
      // Predicated region
      $region9: #{tpu_custom_call.1} parent=5 // pred_check
        _
      $region10: #{tpu_custom_call.1} parent=5 // pred_check_branch
        %139 = sbr.rel (%p136) target = $region12
      $region11: #{tpu_custom_call.1} parent=5 // pred_region
        %s140 = ssub.s32 %s11, 1
        // Predicated region
        $region13: #{tpu_custom_call.1} parent=11 // pred_check
          %p141 = pneg %p58
        $region14: #{tpu_custom_call.1} parent=11 // pred_check_branch
          %143 = sbr.rel (%p141) target = $region16
        $region15: #{tpu_custom_call.1} parent=11 // pred_region
          _
        $region16: #{tpu_custom_call.1} parent=11 // pred_fallthru
          _
        // Predicated region
        $region17: #{tpu_custom_call.1} parent=11 // pred_check
          %p144 = pneg %p79
        $region18: #{tpu_custom_call.1} parent=11 // pred_check_branch
          %146 = sbr.rel (%p144) target = $region20
        $region19: #{tpu_custom_call.1} parent=11 // pred_region
          _
        $region20: #{tpu_custom_call.1} parent=11 // pred_fallthru
          _
        // Predicated region
        $region21: #{tpu_custom_call.1} parent=11 // pred_check
          %p147 = pneg %p100
        $region22: #{tpu_custom_call.1} parent=11 // pred_check_branch
          %149 = sbr.rel (%p147) target = $region24
        $region23: #{tpu_custom_call.1} parent=11 // pred_region
          %s151 = ssub.s32 16, 16
          %152 = vsyncadd [#allocation3], %s151
          %s154 = sshll.u32 %s3, 4
          %s155 = int_to_ptr.vmem [resolvable:$true] %s154
          %157 = dma.vmem_to_smem %s155, 16, [#allocation2], [#allocation3]
        $region24: #{tpu_custom_call.1} parent=11 // pred_fallthru
          _
      $region12: #{tpu_custom_call.1} parent=5 // pred_fallthru
        _
      %p158 = scmp.lt.s32.totalorder %s11, 2
      // Predicated region
      $region25: #{tpu_custom_call.1} parent=5 // pred_check
        %p159 = pneg %p158
      $region26: #{tpu_custom_call.1} parent=5 // pred_check_branch
        %161 = sbr.rel (%p159) target = $region28
      $region27: #{tpu_custom_call.1} parent=5 // pred_region
        // Predicated region
        $region29: #{tpu_custom_call.1} parent=27 // pred_check
          %p162 = pneg %p31
        $region30: #{tpu_custom_call.1} parent=27 // pred_check_branch
          %164 = sbr.rel (%p162) target = $region32
        $region31: #{tpu_custom_call.1} parent=27 // pred_region
          %s165 = smul.u32 16, %s11
          %p166 = scmp.lt.s32.totalorder %s165, 31
          %s167 = scalar_select %p166, %s165, 31
          %s168 = smul.addr %s167, 7
          %s169 = smul.addr %s168, 8
          %s170 = scalar_lea.vmem %s0, %s169
          %s171 = smul.u32 16, %s11
        $region32: #{tpu_custom_call.1} parent=27 // pred_fallthru
          _
      $region28: #{tpu_custom_call.1} parent=5 // pred_fallthru
        _
      %p172 = scmp.le.s32.totalorder 1, %s11
      %p173 = scmp.lt.s32.totalorder %s11, 3
      %p174 = pnand %p172, %p173
      %p175 = pneg %p174
      // Predicated region
      $region33: #{tpu_custom_call.1} parent=5 // pred_check
        _
      $region34: #{tpu_custom_call.1} parent=5 // pred_check_branch
        %177 = sbr.rel (%p174) target = $region36
      $region35: #{tpu_custom_call.1} parent=5 // pred_region
        %s178 = ssub.s32 %s11, 1
        // Predicated region
        $region37: #{tpu_custom_call.1} parent=35 // pred_check
          %p179 = pneg %p100
        $region38: #{tpu_custom_call.1} parent=35 // pred_check_branch
          %181 = sbr.rel (%p179) target = $region40
        $region39: #{tpu_custom_call.1} parent=35 // pred_region
          %182 = dma.done [#allocation3], 16
        $region40: #{tpu_custom_call.1} parent=35 // pred_fallthru
          _
        %183 = sfence
        %s184 = smul.u32 16, %s16
        %p185 = scmp.lt.s32.totalorder %s184, 31
        %s186 = scalar_select %p185, %s184, 31
        %s187 = smul.addr %s186, 7
        %s188 = smul.addr %s187, 8
        %s189 = scalar_lea.vmem %s0, %s188
        %p190 = pneg %p37
        %p191 = pneg %p34
        %p192 = pneg %p58
        %p193 = pneg %p55
        %p194 = pneg %p79
        %p195 = pneg %p76
        %p196 = pneg %p100
        %p197 = pneg %p97
        %p198 = pneg %p126
        %p199 = pneg %p123
        %s200 = smul.u32 16, %s16
        %p201 = scmp.lt.s32.totalorder %s200, 31
        %s202 = scalar_select %p201, %s200, 31
        %s203 = smul.addr %s202, 8
        %s204 = scalar_lea.vmem %s4, %s203
        %s205 = smul.u32 16, %s16
        %p206 = scmp.lt.s32.totalorder %s205, 31
        %s207 = scalar_select %p206, %s205, 31
        %s208 = smul.addr %s207, 7
        %s209 = smul.addr %s208, 8
        %s210 = scalar_lea.vmem %s0, %s209
        %s211 = smul.u32 16, %s16
        %s212 = smul.u32 16, %s16
        %p213 = scmp.lt.s32.totalorder %s212, 31
        %s214 = scalar_select %p213, %s212, 31
        %s215 = smul.addr %s214, 8
        %s216 = scalar_lea.vmem %s4, %s215
        %s217 = smul.u32 16, %s16
        %v219 = vld [vmem:[%s210] sm:$0xff]
        %v220 = vld [vmem:[%s210 + $0x8] sm:$0xff]
        %v221 = vld [vmem:[%s210 + $0x10] sm:$0xff]
        %v222 = vld [vmem:[%s210 + $0x18] sm:$0xff]
        %v223 = vld [vmem:[%s210 + $0x20] sm:$0xff]
        %v224 = vld [vmem:[%s210 + $0x28] sm:$0xff]
        %v225 = vld [vmem:[%s210 + $0x30] sm:$0xff]
        %v226 = vld [vmem:[%s210 + $0x38] sm:$0xff]
        %v227 = vld [vmem:[%s210 + $0x40] sm:$0xff]
        %v228 = vld [vmem:[%s210 + $0x48] sm:$0xff]
        %v229 = vld [vmem:[%s210 + $0x50] sm:$0xff]
        %v230 = vld [vmem:[%s210 + $0x58] sm:$0xff]
        %v231 = vld [vmem:[%s210 + $0x60] sm:$0xff]
        %v232 = vld [vmem:[%s210 + $0x68] sm:$0xff]
        %v233 = vld [vmem:[%s210 + $0x70] sm:$0xff]
        %v234 = vld [vmem:[%s210 + $0x78] sm:$0xff]
        %v235 = vld [vmem:[%s210 + $0x80] sm:$0xff]
        %v236 = vld [vmem:[%s210 + $0x88] sm:$0xff]
        %v237 = vld [vmem:[%s210 + $0x90] sm:$0xff]
        %v238 = vld [vmem:[%s210 + $0x98] sm:$0xff]
        %v239 = vld [vmem:[%s210 + $0xa0] sm:$0xff]
        %v240 = vld [vmem:[%s210 + $0xa8] sm:$0xff]
        %v241 = vld [vmem:[%s210 + $0xb0] sm:$0xff]
        %v242 = vld [vmem:[%s210 + $0xb8] sm:$0xff]
        %v243 = vld [vmem:[%s210 + $0xc0] sm:$0xff]
        %v244 = vld [vmem:[%s210 + $0xc8] sm:$0xff]
        %v245 = vld [vmem:[%s210 + $0xd0] sm:$0xff]
        %v246 = vld [vmem:[%s210 + $0xd8] sm:$0xff]
        %v247 = vld [vmem:[%s210 + $0xe0] sm:$0xff]
        %v248 = vld [vmem:[%s210 + $0xe8] sm:$0xff]
        %v249 = vld [vmem:[%s210 + $0xf0] sm:$0xff]
        %v250 = vld [vmem:[%s210 + $0xf8] sm:$0xff]
        %v251 = vld [vmem:[%s210 + $0x100] sm:$0xff]
        %v252 = vld [vmem:[%s210 + $0x108] sm:$0xff]
        %v253 = vld [vmem:[%s210 + $0x110] sm:$0xff]
        %v254 = vld [vmem:[%s210 + $0x118] sm:$0xff]
        %v255 = vld [vmem:[%s210 + $0x120] sm:$0xff]
        %v256 = vld [vmem:[%s210 + $0x128] sm:$0xff]
        %v257 = vld [vmem:[%s210 + $0x130] sm:$0xff]
        %v258 = vld [vmem:[%s210 + $0x138] sm:$0xff]
        %v259 = vld [vmem:[%s210 + $0x140] sm:$0xff]
        %v260 = vld [vmem:[%s210 + $0x148] sm:$0xff]
        %v261 = vld [vmem:[%s210 + $0x150] sm:$0xff]
        %v262 = vld [vmem:[%s210 + $0x158] sm:$0xff]
        %v263 = vld [vmem:[%s210 + $0x160] sm:$0xff]
        %v264 = vld [vmem:[%s210 + $0x168] sm:$0xff]
        %v265 = vld [vmem:[%s210 + $0x170] sm:$0xff]
        %v266 = vld [vmem:[%s210 + $0x178] sm:$0xff]
        %v267 = vld [vmem:[%s210 + $0x180] sm:$0xff]
        %v268 = vld [vmem:[%s210 + $0x188] sm:$0xff]
        %v269 = vld [vmem:[%s210 + $0x190] sm:$0xff]
        %v270 = vld [vmem:[%s210 + $0x198] sm:$0xff]
        %v271 = vld [vmem:[%s210 + $0x1a0] sm:$0xff]
        %v272 = vld [vmem:[%s210 + $0x1a8] sm:$0xff]
        %v273 = vld [vmem:[%s210 + $0x1b0] sm:$0xff]
        %v274 = vld [vmem:[%s210 + $0x1b8] sm:$0xff]
        %v275 = vld [vmem:[%s210 + $0x1c0] sm:$0xff]
        %v276 = vld [vmem:[%s210 + $0x1c8] sm:$0xff]
        %v277 = vld [vmem:[%s210 + $0x1d0] sm:$0xff]
        %v278 = vld [vmem:[%s210 + $0x1d8] sm:$0xff]
        %v279 = vld [vmem:[%s210 + $0x1e0] sm:$0xff]
        %v280 = vld [vmem:[%s210 + $0x1e8] sm:$0xff]
        %v281 = vld [vmem:[%s210 + $0x1f0] sm:$0xff]
        %v282 = vld [vmem:[%s210 + $0x1f8] sm:$0xff]
        %v283 = vld [vmem:[%s210 + $0x200] sm:$0xff]
        %v284 = vld [vmem:[%s210 + $0x208] sm:$0xff]
        %v285 = vld [vmem:[%s210 + $0x210] sm:$0xff]
        %v286 = vld [vmem:[%s210 + $0x218] sm:$0xff]
        %v287 = vld [vmem:[%s210 + $0x220] sm:$0xff]
        %v288 = vld [vmem:[%s210 + $0x228] sm:$0xff]
        %v289 = vld [vmem:[%s210 + $0x230] sm:$0xff]
        %v290 = vld [vmem:[%s210 + $0x238] sm:$0xff]
        %v291 = vld [vmem:[%s210 + $0x240] sm:$0xff]
        %v292 = vld [vmem:[%s210 + $0x248] sm:$0xff]
        %v293 = vld [vmem:[%s210 + $0x250] sm:$0xff]
        %v294 = vld [vmem:[%s210 + $0x258] sm:$0xff]
        %v295 = vld [vmem:[%s210 + $0x260] sm:$0xff]
        %v296 = vld [vmem:[%s210 + $0x268] sm:$0xff]
        %v297 = vld [vmem:[%s210 + $0x270] sm:$0xff]
        %v298 = vld [vmem:[%s210 + $0x278] sm:$0xff]
        %v299 = vld [vmem:[%s210 + $0x280] sm:$0xff]
        %v300 = vld [vmem:[%s210 + $0x288] sm:$0xff]
        %v301 = vld [vmem:[%s210 + $0x290] sm:$0xff]
        %v302 = vld [vmem:[%s210 + $0x298] sm:$0xff]
        %v303 = vld [vmem:[%s210 + $0x2a0] sm:$0xff]
        %v304 = vld [vmem:[%s210 + $0x2a8] sm:$0xff]
        %v305 = vld [vmem:[%s210 + $0x2b0] sm:$0xff]
        %v306 = vld [vmem:[%s210 + $0x2b8] sm:$0xff]
        %v307 = vld [vmem:[%s210 + $0x2c0] sm:$0xff]
        %v308 = vld [vmem:[%s210 + $0x2c8] sm:$0xff]
        %v309 = vld [vmem:[%s210 + $0x2d0] sm:$0xff]
        %v310 = vld [vmem:[%s210 + $0x2d8] sm:$0xff]
        %v311 = vld [vmem:[%s210 + $0x2e0] sm:$0xff]
        %v312 = vld [vmem:[%s210 + $0x2e8] sm:$0xff]
        %v313 = vld [vmem:[%s210 + $0x2f0] sm:$0xff]
        %v314 = vld [vmem:[%s210 + $0x2f8] sm:$0xff]
        %v315 = vld [vmem:[%s210 + $0x300] sm:$0xff]
        %v316 = vld [vmem:[%s210 + $0x308] sm:$0xff]
        %v317 = vld [vmem:[%s210 + $0x310] sm:$0xff]
        %v318 = vld [vmem:[%s210 + $0x318] sm:$0xff]
        %v319 = vld [vmem:[%s210 + $0x320] sm:$0xff]
        %v320 = vld [vmem:[%s210 + $0x328] sm:$0xff]
        %v321 = vld [vmem:[%s210 + $0x330] sm:$0xff]
        %v322 = vld [vmem:[%s210 + $0x338] sm:$0xff]
        %v323 = vld [vmem:[%s210 + $0x340] sm:$0xff]
        %v324 = vld [vmem:[%s210 + $0x348] sm:$0xff]
        %v325 = vld [vmem:[%s210 + $0x350] sm:$0xff]
        %v326 = vld [vmem:[%s210 + $0x358] sm:$0xff]
        %v327 = vld [vmem:[%s210 + $0x360] sm:$0xff]
        %v328 = vld [vmem:[%s210 + $0x368] sm:$0xff]
        %v329 = vld [vmem:[%s210 + $0x370] sm:$0xff]
        %v330 = vld [vmem:[%s210 + $0x378] sm:$0xff]
        %v331 = vpack.c.bf16 %v226, %v219
        %v332 = vpack.c.bf16 %v227, %v220
        %v333 = vpack.c.bf16 %v228, %v221
        %v334 = vpack.c.bf16 %v229, %v222
        %v335 = vpack.c.bf16 %v230, %v223
        %v336 = vpack.c.bf16 %v231, %v224
        %v337 = vpack.c.bf16 %v232, %v225
        %v338 = vpack.c.bf16 %v240, %v233
        %v339 = vpack.c.bf16 %v241, %v234
        %v340 = vpack.c.bf16 %v242, %v235
        %v341 = vpack.c.bf16 %v243, %v236
        %v342 = vpack.c.bf16 %v244, %v237
        %v343 = vpack.c.bf16 %v245, %v238
        %v344 = vpack.c.bf16 %v246, %v239
        %v345 = vpack.c.bf16 %v254, %v247
        %v346 = vpack.c.bf16 %v255, %v248
        %v347 = vpack.c.bf16 %v256, %v249
        %v348 = vpack.c.bf16 %v257, %v250
        %v349 = vpack.c.bf16 %v258, %v251
        %v350 = vpack.c.bf16 %v259, %v252
        %v351 = vpack.c.bf16 %v260, %v253
        %v352 = vpack.c.bf16 %v268, %v261
        %v353 = vpack.c.bf16 %v269, %v262
        %v354 = vpack.c.bf16 %v270, %v263
        %v355 = vpack.c.bf16 %v271, %v264
        %v356 = vpack.c.bf16 %v272, %v265
        %v357 = vpack.c.bf16 %v273, %v266
        %v358 = vpack.c.bf16 %v274, %v267
        %v359 = vpack.c.bf16 %v282, %v275
        %v360 = vpack.c.bf16 %v283, %v276
        %v361 = vpack.c.bf16 %v284, %v277
        %v362 = vpack.c.bf16 %v285, %v278
        %v363 = vpack.c.bf16 %v286, %v279
        %v364 = vpack.c.bf16 %v287, %v280
        %v365 = vpack.c.bf16 %v288, %v281
        %v366 = vpack.c.bf16 %v296, %v289
        %v367 = vpack.c.bf16 %v297, %v290
        %v368 = vpack.c.bf16 %v298, %v291
        %v369 = vpack.c.bf16 %v299, %v292
        %v370 = vpack.c.bf16 %v300, %v293
        %v371 = vpack.c.bf16 %v301, %v294
        %v372 = vpack.c.bf16 %v302, %v295
        %v373 = vpack.c.bf16 %v310, %v303
        %v374 = vpack.c.bf16 %v311, %v304
        %v375 = vpack.c.bf16 %v312, %v305
        %v376 = vpack.c.bf16 %v313, %v306
        %v377 = vpack.c.bf16 %v314, %v307
        %v378 = vpack.c.bf16 %v315, %v308
        %v379 = vpack.c.bf16 %v316, %v309
        %v380 = vpack.c.bf16 %v324, %v317
        %v381 = vpack.c.bf16 %v325, %v318
        %v382 = vpack.c.bf16 %v326, %v319
        %v383 = vpack.c.bf16 %v327, %v320
        %v384 = vpack.c.bf16 %v328, %v321
        %v385 = vpack.c.bf16 %v329, %v322
        %v386 = vpack.c.bf16 %v330, %v323
        %v387 = vld [vmem:[%s1] sm:$0xff]
        %v388 = vld [vmem:[%s1 + $0x8] sm:$0xff]
        %v389 = vld [vmem:[%s1 + $0x10] sm:$0xff]
        %v390 = vld [vmem:[%s1 + $0x18] sm:$0xff]
        %v391 = vld [vmem:[%s1 + $0x20] sm:$0xff]
        %v392 = vld [vmem:[%s1 + $0x28] sm:$0xff]
        %v393 = vld [vmem:[%s1 + $0x30] sm:$0xff]
        %v394 = vld [vmem:[%s1 + $0x38] sm:$0xff]
        %v395 = vld [vmem:[%s1 + $0x40] sm:$0xff]
        %v396 = vld [vmem:[%s1 + $0x48] sm:$0xff]
        %v397 = vld [vmem:[%s1 + $0x50] sm:$0xff]
        %v398 = vld [vmem:[%s1 + $0x58] sm:$0xff]
        %v399 = vld [vmem:[%s1 + $0x60] sm:$0xff]
        %v400 = vld [vmem:[%s1 + $0x68] sm:$0xff]
        %v401 = vld [vmem:[%s1 + $0x70] sm:$0xff]
        %v402 = vld [vmem:[%s1 + $0x78] sm:$0xff]
        %v403 = vld [vmem:[%s1 + $0x80] sm:$0xff]
        %v404 = vld [vmem:[%s1 + $0x88] sm:$0xff]
        %v405 = vld [vmem:[%s1 + $0x90] sm:$0xff]
        %v406 = vld [vmem:[%s1 + $0x98] sm:$0xff]
        %v407 = vld [vmem:[%s1 + $0xa0] sm:$0xff]
        %v408 = vld [vmem:[%s1 + $0xa8] sm:$0xff]
        %v409 = vld [vmem:[%s1 + $0xb0] sm:$0xff]
        %v410 = vld [vmem:[%s1 + $0xb8] sm:$0xff]
        %v411 = vld [vmem:[%s1 + $0xc0] sm:$0xff]
        %v412 = vld [vmem:[%s1 + $0xc8] sm:$0xff]
        %v413 = vld [vmem:[%s1 + $0xd0] sm:$0xff]
        %v414 = vld [vmem:[%s1 + $0xd8] sm:$0xff]
        %v415 = vld [vmem:[%s1 + $0xe0] sm:$0xff]
        %v416 = vld [vmem:[%s1 + $0xe8] sm:$0xff]
        %v417 = vld [vmem:[%s1 + $0xf0] sm:$0xff]
        %v418 = vld [vmem:[%s1 + $0xf8] sm:$0xff]
        %v419 = vld [vmem:[%s1 + $0x100] sm:$0xff]
        %v420 = vld [vmem:[%s1 + $0x108] sm:$0xff]
        %v421 = vld [vmem:[%s1 + $0x110] sm:$0xff]
        %v422 = vld [vmem:[%s1 + $0x118] sm:$0xff]
        %v423 = vld [vmem:[%s1 + $0x120] sm:$0xff]
        %v424 = vld [vmem:[%s1 + $0x128] sm:$0xff]
        %v425 = vld [vmem:[%s1 + $0x130] sm:$0xff]
        %v426 = vld [vmem:[%s1 + $0x138] sm:$0xff]
        %v427 = vld [vmem:[%s1 + $0x140] sm:$0xff]
        %v428 = vld [vmem:[%s1 + $0x148] sm:$0xff]
        %v429 = vld [vmem:[%s1 + $0x150] sm:$0xff]
        %v430 = vld [vmem:[%s1 + $0x158] sm:$0xff]
        %v431 = vld [vmem:[%s1 + $0x160] sm:$0xff]
        %v432 = vld [vmem:[%s1 + $0x168] sm:$0xff]
        %v433 = vld [vmem:[%s1 + $0x170] sm:$0xff]
        %v434 = vld [vmem:[%s1 + $0x178] sm:$0xff]
        %v435 = vld [vmem:[%s1 + $0x180] sm:$0xff]
        %v436 = vld [vmem:[%s1 + $0x188] sm:$0xff]
        %v437 = vld [vmem:[%s1 + $0x190] sm:$0xff]
        %v438 = vld [vmem:[%s1 + $0x198] sm:$0xff]
        %v439 = vld [vmem:[%s1 + $0x1a0] sm:$0xff]
        %v440 = vld [vmem:[%s1 + $0x1a8] sm:$0xff]
        %v441 = vld [vmem:[%s1 + $0x1b0] sm:$0xff]
        %v442 = vld [vmem:[%s1 + $0x1b8] sm:$0xff]
        %v443 = vld [vmem:[%s1 + $0x1c0] sm:$0xff]
        %v444 = vld [vmem:[%s1 + $0x1c8] sm:$0xff]
        %v445 = vld [vmem:[%s1 + $0x1d0] sm:$0xff]
        %v446 = vld [vmem:[%s1 + $0x1d8] sm:$0xff]
        %v447 = vld [vmem:[%s1 + $0x1e0] sm:$0xff]
        %v448 = vld [vmem:[%s1 + $0x1e8] sm:$0xff]
        %v449 = vld [vmem:[%s1 + $0x1f0] sm:$0xff]
        %v450 = vld [vmem:[%s1 + $0x1f8] sm:$0xff]
        %v451 = vld [vmem:[%s1 + $0x200] sm:$0xff]
        %v452 = vld [vmem:[%s1 + $0x208] sm:$0xff]
        %v453 = vld [vmem:[%s1 + $0x210] sm:$0xff]
        %v454 = vld [vmem:[%s1 + $0x218] sm:$0xff]
        %v455 = vld [vmem:[%s1 + $0x220] sm:$0xff]
        %v456 = vld [vmem:[%s1 + $0x228] sm:$0xff]
        %v457 = vld [vmem:[%s1 + $0x230] sm:$0xff]
        %v458 = vld [vmem:[%s1 + $0x238] sm:$0xff]
        %v459 = vld [vmem:[%s1 + $0x240] sm:$0xff]
        %v460 = vld [vmem:[%s1 + $0x248] sm:$0xff]
        %v461 = vld [vmem:[%s1 + $0x250] sm:$0xff]
        %v462 = vld [vmem:[%s1 + $0x258] sm:$0xff]
        %v463 = vld [vmem:[%s1 + $0x260] sm:$0xff]
        %v464 = vld [vmem:[%s1 + $0x268] sm:$0xff]
        %v465 = vld [vmem:[%s1 + $0x270] sm:$0xff]
        %v466 = vld [vmem:[%s1 + $0x278] sm:$0xff]
        %v467 = vld [vmem:[%s1 + $0x280] sm:$0xff]
        %v468 = vld [vmem:[%s1 + $0x288] sm:$0xff]
        %v469 = vld [vmem:[%s1 + $0x290] sm:$0xff]
        %v470 = vld [vmem:[%s1 + $0x298] sm:$0xff]
        %v471 = vld [vmem:[%s1 + $0x2a0] sm:$0xff]
        %v472 = vld [vmem:[%s1 + $0x2a8] sm:$0xff]
        %v473 = vld [vmem:[%s1 + $0x2b0] sm:$0xff]
        %v474 = vld [vmem:[%s1 + $0x2b8] sm:$0xff]
        %v475 = vld [vmem:[%s1 + $0x2c0] sm:$0xff]
        %v476 = vld [vmem:[%s1 + $0x2c8] sm:$0xff]
        %v477 = vld [vmem:[%s1 + $0x2d0] sm:$0xff]
        %v478 = vld [vmem:[%s1 + $0x2d8] sm:$0xff]
        %v479 = vld [vmem:[%s1 + $0x2e0] sm:$0xff]
        %v480 = vld [vmem:[%s1 + $0x2e8] sm:$0xff]
        %v481 = vld [vmem:[%s1 + $0x2f0] sm:$0xff]
        %v482 = vld [vmem:[%s1 + $0x2f8] sm:$0xff]
        %v483 = vld [vmem:[%s1 + $0x300] sm:$0xff]
        %v484 = vld [vmem:[%s1 + $0x308] sm:$0xff]
        %v485 = vld [vmem:[%s2] ss:$2 sm:$0x3]
        %v487 = vlaneseq
        %v488 = vshrl.u32 %v487, 7
        %v489 = vsub.s32 0, %v488
        %v490 = vrot.slane %v485, %v489
        %v491 = vlaneseq
        %v492 = vshrl.u32 %v491, 7
        %v493 = vsub.s32 1, %v492
        %v494 = vrot.slane %v485, %v493
        %v595 = vunpack.c.l.b16 %v387
        %v596 = vunpack.c.h.b16 %v387
        %v597 = vunpack.c.l.b16 %v388
        %v598 = vunpack.c.h.b16 %v388
        %v599 = vunpack.c.l.b16 %v389
        %v600 = vunpack.c.h.b16 %v389
        %v601 = vunpack.c.l.b16 %v390
        %v602 = vunpack.c.h.b16 %v390
        %v603 = vunpack.c.l.b16 %v391
        %v604 = vunpack.c.h.b16 %v391
        %v605 = vunpack.c.l.b16 %v392
        %v606 = vunpack.c.h.b16 %v392
        %v607 = vunpack.c.l.b16 %v393
        %v608 = vunpack.c.h.b16 %v393
        %v609 = vunpack.c.l.b16 %v394
        %v610 = vunpack.c.h.b16 %v394
        %v611 = vunpack.c.l.b16 %v395
        %v612 = vunpack.c.h.b16 %v395
        %v613 = vunpack.c.l.b16 %v396
        %v614 = vunpack.c.h.b16 %v396
        %v615 = vunpack.c.l.b16 %v397
        %v616 = vunpack.c.h.b16 %v397
        %v617 = vunpack.c.l.b16 %v398
        %v618 = vunpack.c.h.b16 %v398
        %v619 = vunpack.c.l.b16 %v399
        %v620 = vunpack.c.h.b16 %v399
        %v621 = vunpack.c.l.b16 %v400
        %v622 = vunpack.c.h.b16 %v400
        %v623 = vunpack.c.l.b16 %v401
        %v624 = vunpack.c.h.b16 %v401
        %v625 = vunpack.c.l.b16 %v402
        %v626 = vunpack.c.h.b16 %v402
        %v627 = vunpack.c.l.b16 %v403
        %v628 = vunpack.c.h.b16 %v403
        %v629 = vunpack.c.l.b16 %v404
        %v630 = vunpack.c.h.b16 %v404
        %v631 = vunpack.c.l.b16 %v405
        %v632 = vunpack.c.h.b16 %v405
        %v633 = vunpack.c.l.b16 %v406
        %v634 = vunpack.c.h.b16 %v406
        %v635 = vunpack.c.l.b16 %v407
        %v636 = vunpack.c.h.b16 %v407
        %v637 = vunpack.c.l.b16 %v408
        %v638 = vunpack.c.h.b16 %v408
        %v639 = vunpack.c.l.b16 %v409
        %v640 = vunpack.c.h.b16 %v409
        %v641 = vunpack.c.l.b16 %v410
        %v642 = vunpack.c.h.b16 %v410
        %v643 = vunpack.c.l.b16 %v411
        %v644 = vunpack.c.h.b16 %v411
        %v645 = vunpack.c.l.b16 %v412
        %v646 = vunpack.c.h.b16 %v412
        %v647 = vunpack.c.l.b16 %v413
        %v648 = vunpack.c.h.b16 %v413
        %v649 = vunpack.c.l.b16 %v414
        %v650 = vunpack.c.h.b16 %v414
        %v651 = vunpack.c.l.b16 %v415
        %v652 = vunpack.c.h.b16 %v415
        %v653 = vunpack.c.l.b16 %v416
        %v654 = vunpack.c.h.b16 %v416
        %v655 = vunpack.c.l.b16 %v417
        %v656 = vunpack.c.h.b16 %v417
        %v657 = vunpack.c.l.b16 %v418
        %v658 = vunpack.c.h.b16 %v418
        %v659 = vunpack.c.l.b16 %v419
        %v660 = vunpack.c.h.b16 %v419
        %v661 = vunpack.c.l.b16 %v420
        %v662 = vunpack.c.h.b16 %v420
        %v663 = vunpack.c.l.b16 %v421
        %v664 = vunpack.c.h.b16 %v421
        %v665 = vunpack.c.l.b16 %v422
        %v666 = vunpack.c.h.b16 %v422
        %v667 = vunpack.c.l.b16 %v423
        %v668 = vunpack.c.h.b16 %v423
        %v669 = vunpack.c.l.b16 %v424
        %v670 = vunpack.c.h.b16 %v424
        %v671 = vunpack.c.l.b16 %v425
        %v672 = vunpack.c.h.b16 %v425
        %v673 = vunpack.c.l.b16 %v426
        %v674 = vunpack.c.h.b16 %v426
        %v675 = vunpack.c.l.b16 %v427
        %v676 = vunpack.c.h.b16 %v427
        %v677 = vunpack.c.l.b16 %v428
        %v678 = vunpack.c.h.b16 %v428
        %v679 = vunpack.c.l.b16 %v429
        %v680 = vunpack.c.h.b16 %v429
        %v681 = vunpack.c.l.b16 %v430
        %v682 = vunpack.c.h.b16 %v430
        %v683 = vunpack.c.l.b16 %v431
        %v684 = vunpack.c.h.b16 %v431
        %v685 = vunpack.c.l.b16 %v432
        %v686 = vunpack.c.h.b16 %v432
        %v687 = vunpack.c.l.b16 %v433
        %v688 = vunpack.c.h.b16 %v433
        %v689 = vunpack.c.l.b16 %v434
        %v690 = vunpack.c.h.b16 %v434
        %v691 = vunpack.c.l.b16 %v435
        %v692 = vunpack.c.h.b16 %v435
        %v693 = vunpack.c.l.b16 %v436
        %v694 = vunpack.c.h.b16 %v436
        %v695 = vunpack.c.l.b16 %v437
        %v696 = vunpack.c.h.b16 %v437
        %v697 = vunpack.c.l.b16 %v438
        %v698 = vunpack.c.h.b16 %v438
        %v699 = vunpack.c.l.b16 %v439
        %v700 = vunpack.c.h.b16 %v439
        %v701 = vunpack.c.l.b16 %v440
        %v702 = vunpack.c.h.b16 %v440
        %v703 = vunpack.c.l.b16 %v441
        %v704 = vunpack.c.h.b16 %v441
        %v705 = vunpack.c.l.b16 %v442
        %v706 = vunpack.c.h.b16 %v442
        %v707 = vunpack.c.l.b16 %v443
        %v708 = vunpack.c.h.b16 %v443
        %v709 = vunpack.c.l.b16 %v444
        %v710 = vunpack.c.h.b16 %v444
        %v711 = vunpack.c.l.b16 %v445
        %v712 = vunpack.c.h.b16 %v445
        %v713 = vunpack.c.l.b16 %v446
        %v714 = vunpack.c.h.b16 %v446
        %v715 = vunpack.c.l.b16 %v447
        %v716 = vunpack.c.h.b16 %v447
        %v717 = vunpack.c.l.b16 %v448
        %v718 = vunpack.c.h.b16 %v448
        %v719 = vunpack.c.l.b16 %v449
        %v720 = vunpack.c.h.b16 %v449
        %v721 = vunpack.c.l.b16 %v450
        %v722 = vunpack.c.h.b16 %v450
        %v723 = vunpack.c.l.b16 %v451
        %v724 = vunpack.c.h.b16 %v451
        %v725 = vunpack.c.l.b16 %v452
        %v726 = vunpack.c.h.b16 %v452
        %v727 = vunpack.c.l.b16 %v453
        %v728 = vunpack.c.h.b16 %v453
        %v729 = vunpack.c.l.b16 %v454
        %v730 = vunpack.c.h.b16 %v454
        %v731 = vunpack.c.l.b16 %v455
        %v732 = vunpack.c.h.b16 %v455
        %v733 = vunpack.c.l.b16 %v456
        %v734 = vunpack.c.h.b16 %v456
        %v735 = vunpack.c.l.b16 %v457
        %v736 = vunpack.c.h.b16 %v457
        %v737 = vunpack.c.l.b16 %v458
        %v738 = vunpack.c.h.b16 %v458
        %v739 = vunpack.c.l.b16 %v459
        %v740 = vunpack.c.h.b16 %v459
        %v741 = vunpack.c.l.b16 %v460
        %v742 = vunpack.c.h.b16 %v460
        %v743 = vunpack.c.l.b16 %v461
        %v744 = vunpack.c.h.b16 %v461
        %v745 = vunpack.c.l.b16 %v462
        %v746 = vunpack.c.h.b16 %v462
        %v747 = vunpack.c.l.b16 %v463
        %v748 = vunpack.c.h.b16 %v463
        %v749 = vunpack.c.l.b16 %v464
        %v750 = vunpack.c.h.b16 %v464
        %v751 = vunpack.c.l.b16 %v465
        %v752 = vunpack.c.h.b16 %v465
        %v753 = vunpack.c.l.b16 %v466
        %v754 = vunpack.c.h.b16 %v466
        %v755 = vunpack.c.l.b16 %v467
        %v756 = vunpack.c.h.b16 %v467
        %v757 = vunpack.c.l.b16 %v468
        %v758 = vunpack.c.h.b16 %v468
        %v759 = vunpack.c.l.b16 %v469
        %v760 = vunpack.c.h.b16 %v469
        %v761 = vunpack.c.l.b16 %v470
        %v762 = vunpack.c.h.b16 %v470
        %v763 = vunpack.c.l.b16 %v471
        %v764 = vunpack.c.h.b16 %v471
        %v765 = vunpack.c.l.b16 %v472
        %v766 = vunpack.c.h.b16 %v472
        %v767 = vunpack.c.l.b16 %v473
        %v768 = vunpack.c.h.b16 %v473
        %v769 = vunpack.c.l.b16 %v474
        %v770 = vunpack.c.h.b16 %v474
        %v771 = vunpack.c.l.b16 %v475
        %v772 = vunpack.c.h.b16 %v475
        %v773 = vunpack.c.l.b16 %v476
        %v774 = vunpack.c.h.b16 %v476
        %v775 = vunpack.c.l.b16 %v477
        %v776 = vunpack.c.h.b16 %v477
        %v777 = vunpack.c.l.b16 %v478
        %v778 = vunpack.c.h.b16 %v478
        %v779 = vunpack.c.l.b16 %v479
        %v780 = vunpack.c.h.b16 %v479
        %v781 = vunpack.c.l.b16 %v480
        %v782 = vunpack.c.h.b16 %v480
        %v783 = vunpack.c.l.b16 %v481
        %v784 = vunpack.c.h.b16 %v481
        %v785 = vunpack.c.l.b16 %v482
        %v786 = vunpack.c.h.b16 %v482
        %v787 = vunpack.c.l.b16 %v483
        %v788 = vunpack.c.h.b16 %v483
        %v789 = vunpack.c.l.b16 %v484
        %v790 = vunpack.c.h.b16 %v484
        %v791 = vpack.c.b16 %v597, %v595
        %v792 = vpack.c.b16 %v598, %v596
        %v793 = vpack.c.b16 %v601, %v599
        %v794 = vpack.c.b16 %v602, %v600
        %v795 = vpack.c.b16 %v605, %v603
        %v796 = vpack.c.b16 %v606, %v604
        %v797 = vpack.c.b16 %v609, %v607
        %v798 = vpack.c.b16 %v610, %v608
        %v799 = vpack.c.b16 %v613, %v611
        %v800 = vpack.c.b16 %v614, %v612
        %v801 = vpack.c.b16 %v617, %v615
        %v802 = vpack.c.b16 %v618, %v616
        %v803 = vpack.c.b16 %v621, %v619
        %v804 = vpack.c.b16 %v622, %v620
        %v805 = vpack.c.b16 %v625, %v623
        %v806 = vpack.c.b16 %v626, %v624
        %v807 = vpack.c.b16 %v629, %v627
        %v808 = vpack.c.b16 %v630, %v628
        %v809 = vpack.c.b16 %v633, %v631
        %v810 = vpack.c.b16 %v634, %v632
        %v811 = vpack.c.b16 %v637, %v635
        %v812 = vpack.c.b16 %v638, %v636
        %v813 = vpack.c.b16 %v641, %v639
        %v814 = vpack.c.b16 %v642, %v640
        %v815 = vpack.c.b16 %v645, %v643
        %v816 = vpack.c.b16 %v646, %v644
        %v817 = vpack.c.b16 %v649, %v647
        %v818 = vpack.c.b16 %v650, %v648
        %v819 = vpack.c.b16 %v653, %v651
        %v820 = vpack.c.b16 %v654, %v652
        %v821 = vpack.c.b16 %v657, %v655
        %v822 = vpack.c.b16 %v658, %v656
        %v823 = vpack.c.b16 %v661, %v659
        %v824 = vpack.c.b16 %v662, %v660
        %v825 = vpack.c.b16 %v665, %v663
        %v826 = vpack.c.b16 %v666, %v664
        %v827 = vpack.c.b16 %v669, %v667
        %v828 = vpack.c.b16 %v670, %v668
        %v829 = vpack.c.b16 %v673, %v671
        %v830 = vpack.c.b16 %v674, %v672
        %v831 = vpack.c.b16 %v677, %v675
        %v832 = vpack.c.b16 %v678, %v676
        %v833 = vpack.c.b16 %v681, %v679
        %v834 = vpack.c.b16 %v682, %v680
        %v835 = vpack.c.b16 %v685, %v683
        %v836 = vpack.c.b16 %v686, %v684
        %v837 = vpack.c.b16 %v689, %v687
        %v838 = vpack.c.b16 %v690, %v688
        %v839 = vpack.c.b16 %v693, %v691
        %v840 = vpack.c.b16 %v694, %v692
        %v841 = vpack.c.b16 %v697, %v695
        %v842 = vpack.c.b16 %v698, %v696
        %v843 = vpack.c.b16 %v701, %v699
        %v844 = vpack.c.b16 %v702, %v700
        %v845 = vpack.c.b16 %v705, %v703
        %v846 = vpack.c.b16 %v706, %v704
        %v847 = vpack.c.b16 %v709, %v707
        %v848 = vpack.c.b16 %v710, %v708
        %v849 = vpack.c.b16 %v713, %v711
        %v850 = vpack.c.b16 %v714, %v712
        %v851 = vpack.c.b16 %v717, %v715
        %v852 = vpack.c.b16 %v718, %v716
        %v853 = vpack.c.b16 %v721, %v719
        %v854 = vpack.c.b16 %v722, %v720
        %v855 = vpack.c.b16 %v725, %v723
        %v856 = vpack.c.b16 %v726, %v724
        %v857 = vpack.c.b16 %v729, %v727
        %v858 = vpack.c.b16 %v730, %v728
        %v859 = vpack.c.b16 %v733, %v731
        %v860 = vpack.c.b16 %v734, %v732
        %v861 = vpack.c.b16 %v737, %v735
        %v862 = vpack.c.b16 %v738, %v736
        %v863 = vpack.c.b16 %v741, %v739
        %v864 = vpack.c.b16 %v742, %v740
        %v865 = vpack.c.b16 %v745, %v743
        %v866 = vpack.c.b16 %v746, %v744
        %v867 = vpack.c.b16 %v749, %v747
        %v868 = vpack.c.b16 %v750, %v748
        %v869 = vpack.c.b16 %v753, %v751
        %v870 = vpack.c.b16 %v754, %v752
        %v871 = vpack.c.b16 %v757, %v755
        %v872 = vpack.c.b16 %v758, %v756
        %v873 = vpack.c.b16 %v761, %v759
        %v874 = vpack.c.b16 %v762, %v760
        %v875 = vpack.c.b16 %v765, %v763
        %v876 = vpack.c.b16 %v766, %v764
        %v877 = vpack.c.b16 %v769, %v767
        %v878 = vpack.c.b16 %v770, %v768
        %v879 = vpack.c.b16 %v773, %v771
        %v880 = vpack.c.b16 %v774, %v772
        %v881 = vpack.c.b16 %v777, %v775
        %v882 = vpack.c.b16 %v778, %v776
        %v883 = vpack.c.b16 %v781, %v779
        %v884 = vpack.c.b16 %v782, %v780
        %v885 = vpack.c.b16 %v785, %v783
        %v886 = vpack.c.b16 %v786, %v784
        %v887 = vpack.c.b16 %v789, %v787
        %v888 = vpack.c.b16 %v790, %v788
        %vm987 = vcmask 130048
        %v989 = vsel %vm987, %v337, 0
        %v992 = vsel %vm987, %v344, 0
        %v995 = vsel %vm987, %v351, 0
        %v998 = vsel %vm987, %v358, 0
        %v1001 = vsel %vm987, %v365, 0
        %v1004 = vsel %vm987, %v372, 0
        %v1007 = vsel %vm987, %v379, 0
        %v1010 = vsel %vm987, %v386, 0
        %1012 = vmatprep.subr.bf16.mxu0 %v806
        %1013 = vmatpush1.bf16.msra.mxu0 %v805
        %1014 = vmatprep.subr.bf16.mxu0 %v804
        %1015 = vmatpush1.bf16.msra.mxu0 %v803
        %1016 = vmatprep.subr.bf16.mxu0 %v802
        %1017 = vmatpush1.bf16.msra.mxu0 %v801
        %1018 = vmatprep.subr.bf16.mxu0 %v800
        %1019 = vmatpush1.bf16.msra.mxu0 %v799
        %1020 = vmatprep.subr.bf16.mxu0 %v798
        %1021 = vmatpush1.bf16.msra.mxu0 %v797
        %1022 = vmatprep.subr.bf16.mxu0 %v796
        %1023 = vmatpush1.bf16.msra.mxu0 %v795
        %1024 = vmatprep.subr.bf16.mxu0 %v794
        %1025 = vmatpush1.bf16.msra.mxu0 %v793
        %1026 = vmatprep.subr.bf16.mxu0 %v792
        %1027 = vmatpush1.bf16.msra.mxu0 %v791
        %1028 = vmatprep.subr.bf16.mxu0 %v822
        %1029 = vmatpush2.bf16.msra.mxu0 %v821
        %1030 = vmatprep.subr.bf16.mxu0 %v820
        %1031 = vmatpush2.bf16.msra.mxu0 %v819
        %1032 = vmatprep.subr.bf16.mxu0 %v818
        %1033 = vmatpush2.bf16.msra.mxu0 %v817
        %1034 = vmatprep.subr.bf16.mxu0 %v816
        %1035 = vmatpush2.bf16.msra.mxu0 %v815
        %1036 = vmatprep.subr.bf16.mxu0 %v814
        %1037 = vmatpush2.bf16.msra.mxu0 %v813
        %1038 = vmatprep.subr.bf16.mxu0 %v812
        %1039 = vmatpush2.bf16.msra.mxu0 %v811
        %1040 = vmatprep.subr.bf16.mxu0 %v810
        %1041 = vmatpush2.bf16.msra.mxu0 %v809
        %1042 = vmatprep.subr.bf16.mxu0 %v808
        %1043 = vmatpush2.bf16.msra.mxu0 %v807
        %1044 = vmatprep.mubr.bf16.mxu0 %v332
        %1045 = vmatmul.mubr.bf16.gmra.mxu0 %v331
        %v1046 = vpop.f32.mrf.mxu0
        %v1047 = vadd.f32 %v490, %v1046
        %v1048 = vpop.f32.mrf.mxu0
        %v1049 = vadd.f32 %v494, %v1048
        %v1050 = vpop.f32.mrf.mxu0
        %v1051 = vadd.f32 %v490, %v1050
        %v1052 = vpop.f32.mrf.mxu0
        %v1053 = vadd.f32 %v494, %v1052
        %1054 = vmatprep.mubr.bf16.mxu0 %v339
        %1055 = vmatmul.mubr.bf16.gmra.mxu0 %v338
        %v1056 = vpop.f32.mrf.mxu0
        %v1057 = vadd.f32 %v490, %v1056
        %v1058 = vpop.f32.mrf.mxu0
        %v1059 = vadd.f32 %v494, %v1058
        %v1060 = vpop.f32.mrf.mxu0
        %v1061 = vadd.f32 %v490, %v1060
        %v1062 = vpop.f32.mrf.mxu0
        %v1063 = vadd.f32 %v494, %v1062
        %1064 = vmatprep.mubr.bf16.mxu0 %v346
        %1065 = vmatmul.mubr.bf16.gmra.mxu0 %v345
        %v1066 = vpop.f32.mrf.mxu0
        %v1067 = vadd.f32 %v490, %v1066
        %v1068 = vpop.f32.mrf.mxu0
        %v1069 = vadd.f32 %v494, %v1068
        %v1070 = vpop.f32.mrf.mxu0
        %v1071 = vadd.f32 %v490, %v1070
        %v1072 = vpop.f32.mrf.mxu0
        %v1073 = vadd.f32 %v494, %v1072
        %1074 = vmatprep.mubr.bf16.mxu0 %v353
        %1075 = vmatmul.mubr.bf16.gmra.mxu0 %v352
        %v1076 = vpop.f32.mrf.mxu0
        %v1077 = vadd.f32 %v490, %v1076
        %v1078 = vpop.f32.mrf.mxu0
        %v1079 = vadd.f32 %v494, %v1078
        %v1080 = vpop.f32.mrf.mxu0
        %v1081 = vadd.f32 %v490, %v1080
        %v1082 = vpop.f32.mrf.mxu0
        %v1083 = vadd.f32 %v494, %v1082
        %1084 = vmatprep.mubr.bf16.mxu0 %v360
        %1085 = vmatmul.mubr.bf16.gmra.mxu0 %v359
        %v1086 = vpop.f32.mrf.mxu0
        %v1087 = vadd.f32 %v490, %v1086
        %v1088 = vpop.f32.mrf.mxu0
        %v1089 = vadd.f32 %v494, %v1088
        %v1090 = vpop.f32.mrf.mxu0
        %v1091 = vadd.f32 %v490, %v1090
        %v1092 = vpop.f32.mrf.mxu0
        %v1093 = vadd.f32 %v494, %v1092
        %1094 = vmatprep.mubr.bf16.mxu0 %v367
        %1095 = vmatmul.mubr.bf16.gmra.mxu0 %v366
        %v1096 = vpop.f32.mrf.mxu0
        %v1097 = vadd.f32 %v490, %v1096
        %v1098 = vpop.f32.mrf.mxu0
        %v1099 = vadd.f32 %v494, %v1098
        %v1100 = vpop.f32.mrf.mxu0
        %v1101 = vadd.f32 %v490, %v1100
        %v1102 = vpop.f32.mrf.mxu0
        %v1103 = vadd.f32 %v494, %v1102
        %1104 = vmatprep.mubr.bf16.mxu0 %v374
        %1105 = vmatmul.mubr.bf16.gmra.mxu0 %v373
        %v1106 = vpop.f32.mrf.mxu0
        %v1107 = vadd.f32 %v490, %v1106
        %v1108 = vpop.f32.mrf.mxu0
        %v1109 = vadd.f32 %v494, %v1108
        %v1110 = vpop.f32.mrf.mxu0
        %v1111 = vadd.f32 %v490, %v1110
        %v1112 = vpop.f32.mrf.mxu0
        %v1113 = vadd.f32 %v494, %v1112
        %1114 = vmatprep.mubr.bf16.mxu0 %v381
        %1115 = vmatmul.mubr.bf16.gmra.mxu0 %v380
        %v1116 = vpop.f32.mrf.mxu0
        %v1117 = vadd.f32 %v490, %v1116
        %v1118 = vpop.f32.mrf.mxu0
        %v1119 = vadd.f32 %v494, %v1118
        %v1120 = vpop.f32.mrf.mxu0
        %v1121 = vadd.f32 %v490, %v1120
        %v1122 = vpop.f32.mrf.mxu0
        %v1123 = vadd.f32 %v494, %v1122
        %1124 = vdwg.mxu0
        %1125 = vmatprep.subr.bf16.mxu0 %v838
        %1126 = vmatpush1.bf16.msra.mxu0 %v837
        %1127 = vmatprep.subr.bf16.mxu0 %v836
        %1128 = vmatpush1.bf16.msra.mxu0 %v835
        %1129 = vmatprep.subr.bf16.mxu0 %v834
        %1130 = vmatpush1.bf16.msra.mxu0 %v833
        %1131 = vmatprep.subr.bf16.mxu0 %v832
        %1132 = vmatpush1.bf16.msra.mxu0 %v831
        %1133 = vmatprep.subr.bf16.mxu0 %v830
        %1134 = vmatpush1.bf16.msra.mxu0 %v829
        %1135 = vmatprep.subr.bf16.mxu0 %v828
        %1136 = vmatpush1.bf16.msra.mxu0 %v827
        %1137 = vmatprep.subr.bf16.mxu0 %v826
        %1138 = vmatpush1.bf16.msra.mxu0 %v825
        %1139 = vmatprep.subr.bf16.mxu0 %v824
        %1140 = vmatpush1.bf16.msra.mxu0 %v823
        %1141 = vmatprep.subr.bf16.mxu0 %v854
        %1142 = vmatpush2.bf16.msra.mxu0 %v853
        %1143 = vmatprep.subr.bf16.mxu0 %v852
        %1144 = vmatpush2.bf16.msra.mxu0 %v851
        %1145 = vmatprep.subr.bf16.mxu0 %v850
        %1146 = vmatpush2.bf16.msra.mxu0 %v849
        %1147 = vmatprep.subr.bf16.mxu0 %v848
        %1148 = vmatpush2.bf16.msra.mxu0 %v847
        %1149 = vmatprep.subr.bf16.mxu0 %v846
        %1150 = vmatpush2.bf16.msra.mxu0 %v845
        %1151 = vmatprep.subr.bf16.mxu0 %v844
        %1152 = vmatpush2.bf16.msra.mxu0 %v843
        %1153 = vmatprep.subr.bf16.mxu0 %v842
        %1154 = vmatpush2.bf16.msra.mxu0 %v841
        %1155 = vmatprep.subr.bf16.mxu0 %v840
        %1156 = vmatpush2.bf16.msra.mxu0 %v839
        %1157 = vmatprep.mubr.bf16.mxu0 %v334
        %1158 = vmatmul.mubr.bf16.gmra.mxu0 %v333
        %v1159 = vpop.f32.mrf.mxu0
        %v1160 = vadd.f32 %v1047, %v1159
        %v1161 = vpop.f32.mrf.mxu0
        %v1162 = vadd.f32 %v1049, %v1161
        %v1163 = vpop.f32.mrf.mxu0
        %v1164 = vadd.f32 %v1051, %v1163
        %v1165 = vpop.f32.mrf.mxu0
        %v1166 = vadd.f32 %v1053, %v1165
        %1167 = vmatprep.mubr.bf16.mxu0 %v341
        %1168 = vmatmul.mubr.bf16.gmra.mxu0 %v340
        %v1169 = vpop.f32.mrf.mxu0
        %v1170 = vadd.f32 %v1057, %v1169
        %v1171 = vpop.f32.mrf.mxu0
        %v1172 = vadd.f32 %v1059, %v1171
        %v1173 = vpop.f32.mrf.mxu0
        %v1174 = vadd.f32 %v1061, %v1173
        %v1175 = vpop.f32.mrf.mxu0
        %v1176 = vadd.f32 %v1063, %v1175
        %1177 = vmatprep.mubr.bf16.mxu0 %v348
        %1178 = vmatmul.mubr.bf16.gmra.mxu0 %v347
        %v1179 = vpop.f32.mrf.mxu0
        %v1180 = vadd.f32 %v1067, %v1179
        %v1181 = vpop.f32.mrf.mxu0
        %v1182 = vadd.f32 %v1069, %v1181
        %v1183 = vpop.f32.mrf.mxu0
        %v1184 = vadd.f32 %v1071, %v1183
        %v1185 = vpop.f32.mrf.mxu0
        %v1186 = vadd.f32 %v1073, %v1185
        %1187 = vmatprep.mubr.bf16.mxu0 %v355
        %1188 = vmatmul.mubr.bf16.gmra.mxu0 %v354
        %v1189 = vpop.f32.mrf.mxu0
        %v1190 = vadd.f32 %v1077, %v1189
        %v1191 = vpop.f32.mrf.mxu0
        %v1192 = vadd.f32 %v1079, %v1191
        %v1193 = vpop.f32.mrf.mxu0
        %v1194 = vadd.f32 %v1081, %v1193
        %v1195 = vpop.f32.mrf.mxu0
        %v1196 = vadd.f32 %v1083, %v1195
        %1197 = vmatprep.mubr.bf16.mxu0 %v362
        %1198 = vmatmul.mubr.bf16.gmra.mxu0 %v361
        %v1199 = vpop.f32.mrf.mxu0
        %v1200 = vadd.f32 %v1087, %v1199
        %v1201 = vpop.f32.mrf.mxu0
        %v1202 = vadd.f32 %v1089, %v1201
        %v1203 = vpop.f32.mrf.mxu0
        %v1204 = vadd.f32 %v1091, %v1203
        %v1205 = vpop.f32.mrf.mxu0
        %v1206 = vadd.f32 %v1093, %v1205
        %1207 = vmatprep.mubr.bf16.mxu0 %v369
        %1208 = vmatmul.mubr.bf16.gmra.mxu0 %v368
        %v1209 = vpop.f32.mrf.mxu0
        %v1210 = vadd.f32 %v1097, %v1209
        %v1211 = vpop.f32.mrf.mxu0
        %v1212 = vadd.f32 %v1099, %v1211
        %v1213 = vpop.f32.mrf.mxu0
        %v1214 = vadd.f32 %v1101, %v1213
        %v1215 = vpop.f32.mrf.mxu0
        %v1216 = vadd.f32 %v1103, %v1215
        %1217 = vmatprep.mubr.bf16.mxu0 %v376
        %1218 = vmatmul.mubr.bf16.gmra.mxu0 %v375
        %v1219 = vpop.f32.mrf.mxu0
        %v1220 = vadd.f32 %v1107, %v1219
        %v1221 = vpop.f32.mrf.mxu0
        %v1222 = vadd.f32 %v1109, %v1221
        %v1223 = vpop.f32.mrf.mxu0
        %v1224 = vadd.f32 %v1111, %v1223
        %v1225 = vpop.f32.mrf.mxu0
        %v1226 = vadd.f32 %v1113, %v1225
        %1227 = vmatprep.mubr.bf16.mxu0 %v383
        %1228 = vmatmul.mubr.bf16.gmra.mxu0 %v382
        %v1229 = vpop.f32.mrf.mxu0
        %v1230 = vadd.f32 %v1117, %v1229
        %v1231 = vpop.f32.mrf.mxu0
        %v1232 = vadd.f32 %v1119, %v1231
        %v1233 = vpop.f32.mrf.mxu0
        %v1234 = vadd.f32 %v1121, %v1233
        %v1235 = vpop.f32.mrf.mxu0
        %v1236 = vadd.f32 %v1123, %v1235
        %1237 = vdwg.mxu0
        %1238 = vmatprep.subr.bf16.mxu0 %v870
        %1239 = vmatpush1.bf16.msra.mxu0 %v869
        %1240 = vmatprep.subr.bf16.mxu0 %v868
        %1241 = vmatpush1.bf16.msra.mxu0 %v867
        %1242 = vmatprep.subr.bf16.mxu0 %v866
        %1243 = vmatpush1.bf16.msra.mxu0 %v865
        %1244 = vmatprep.subr.bf16.mxu0 %v864
        %1245 = vmatpush1.bf16.msra.mxu0 %v863
        %1246 = vmatprep.subr.bf16.mxu0 %v862
        %1247 = vmatpush1.bf16.msra.mxu0 %v861
        %1248 = vmatprep.subr.bf16.mxu0 %v860
        %1249 = vmatpush1.bf16.msra.mxu0 %v859
        %1250 = vmatprep.subr.bf16.mxu0 %v858
        %1251 = vmatpush1.bf16.msra.mxu0 %v857
        %1252 = vmatprep.subr.bf16.mxu0 %v856
        %1253 = vmatpush1.bf16.msra.mxu0 %v855
        %1254 = vmatprep.subr.bf16.mxu0 %v886
        %1255 = vmatpush2.bf16.msra.mxu0 %v885
        %1256 = vmatprep.subr.bf16.mxu0 %v884
        %1257 = vmatpush2.bf16.msra.mxu0 %v883
        %1258 = vmatprep.subr.bf16.mxu0 %v882
        %1259 = vmatpush2.bf16.msra.mxu0 %v881
        %1260 = vmatprep.subr.bf16.mxu0 %v880
        %1261 = vmatpush2.bf16.msra.mxu0 %v879
        %1262 = vmatprep.subr.bf16.mxu0 %v878
        %1263 = vmatpush2.bf16.msra.mxu0 %v877
        %1264 = vmatprep.subr.bf16.mxu0 %v876
        %1265 = vmatpush2.bf16.msra.mxu0 %v875
        %1266 = vmatprep.subr.bf16.mxu0 %v874
        %1267 = vmatpush2.bf16.msra.mxu0 %v873
        %1268 = vmatprep.subr.bf16.mxu0 %v872
        %1269 = vmatpush2.bf16.msra.mxu0 %v871
        %1270 = vmatprep.mubr.bf16.mxu0 %v336
        %1271 = vmatmul.mubr.bf16.gmra.mxu0 %v335
        %v1272 = vpop.f32.mrf.mxu0
        %v1273 = vadd.f32 %v1160, %v1272
        %v1274 = vpop.f32.mrf.mxu0
        %v1275 = vadd.f32 %v1162, %v1274
        %v1276 = vpop.f32.mrf.mxu0
        %v1277 = vadd.f32 %v1164, %v1276
        %v1278 = vpop.f32.mrf.mxu0
        %v1279 = vadd.f32 %v1166, %v1278
        %1280 = vmatprep.mubr.bf16.mxu0 %v343
        %1281 = vmatmul.mubr.bf16.gmra.mxu0 %v342
        %v1282 = vpop.f32.mrf.mxu0
        %v1283 = vadd.f32 %v1170, %v1282
        %v1284 = vpop.f32.mrf.mxu0
        %v1285 = vadd.f32 %v1172, %v1284
        %v1286 = vpop.f32.mrf.mxu0
        %v1287 = vadd.f32 %v1174, %v1286
        %v1288 = vpop.f32.mrf.mxu0
        %v1289 = vadd.f32 %v1176, %v1288
        %1290 = vmatprep.mubr.bf16.mxu0 %v350
        %1291 = vmatmul.mubr.bf16.gmra.mxu0 %v349
        %v1292 = vpop.f32.mrf.mxu0
        %v1293 = vadd.f32 %v1180, %v1292
        %v1294 = vpop.f32.mrf.mxu0
        %v1295 = vadd.f32 %v1182, %v1294
        %v1296 = vpop.f32.mrf.mxu0
        %v1297 = vadd.f32 %v1184, %v1296
        %v1298 = vpop.f32.mrf.mxu0
        %v1299 = vadd.f32 %v1186, %v1298
        %1300 = vmatprep.mubr.bf16.mxu0 %v357
        %1301 = vmatmul.mubr.bf16.gmra.mxu0 %v356
        %v1302 = vpop.f32.mrf.mxu0
        %v1303 = vadd.f32 %v1190, %v1302
        %v1304 = vpop.f32.mrf.mxu0
        %v1305 = vadd.f32 %v1192, %v1304
        %v1306 = vpop.f32.mrf.mxu0
        %v1307 = vadd.f32 %v1194, %v1306
        %v1308 = vpop.f32.mrf.mxu0
        %v1309 = vadd.f32 %v1196, %v1308
        %1310 = vmatprep.mubr.bf16.mxu0 %v364
        %1311 = vmatmul.mubr.bf16.gmra.mxu0 %v363
        %v1312 = vpop.f32.mrf.mxu0
        %v1313 = vadd.f32 %v1200, %v1312
        %v1314 = vpop.f32.mrf.mxu0
        %v1315 = vadd.f32 %v1202, %v1314
        %v1316 = vpop.f32.mrf.mxu0
        %v1317 = vadd.f32 %v1204, %v1316
        %v1318 = vpop.f32.mrf.mxu0
        %v1319 = vadd.f32 %v1206, %v1318
        %1320 = vmatprep.mubr.bf16.mxu0 %v371
        %1321 = vmatmul.mubr.bf16.gmra.mxu0 %v370
        %v1322 = vpop.f32.mrf.mxu0
        %v1323 = vadd.f32 %v1210, %v1322
        %v1324 = vpop.f32.mrf.mxu0
        %v1325 = vadd.f32 %v1212, %v1324
        %v1326 = vpop.f32.mrf.mxu0
        %v1327 = vadd.f32 %v1214, %v1326
        %v1328 = vpop.f32.mrf.mxu0
        %v1329 = vadd.f32 %v1216, %v1328
        %1330 = vmatprep.mubr.bf16.mxu0 %v378
        %1331 = vmatmul.mubr.bf16.gmra.mxu0 %v377
        %v1332 = vpop.f32.mrf.mxu0
        %v1333 = vadd.f32 %v1220, %v1332
        %v1334 = vpop.f32.mrf.mxu0
        %v1335 = vadd.f32 %v1222, %v1334
        %v1336 = vpop.f32.mrf.mxu0
        %v1337 = vadd.f32 %v1224, %v1336
        %v1338 = vpop.f32.mrf.mxu0
        %v1339 = vadd.f32 %v1226, %v1338
        %1340 = vmatprep.mubr.bf16.mxu0 %v385
        %1341 = vmatmul.mubr.bf16.gmra.mxu0 %v384
        %v1342 = vpop.f32.mrf.mxu0
        %v1343 = vadd.f32 %v1230, %v1342
        %v1344 = vpop.f32.mrf.mxu0
        %v1345 = vadd.f32 %v1232, %v1344
        %v1346 = vpop.f32.mrf.mxu0
        %v1347 = vadd.f32 %v1234, %v1346
        %v1348 = vpop.f32.mrf.mxu0
        %v1349 = vadd.f32 %v1236, %v1348
        %1350 = vdwg.mxu0
        %1351 = vmatprep.subr.bf16.mxu0 0
        %1352 = vmatpush1.bf16.msra.mxu0 0
        %1353 = vmatprep.subr.bf16.mxu0 0
        %1354 = vmatpush1.bf16.msra.mxu0 0
        %1355 = vmatprep.subr.bf16.mxu0 0
        %1356 = vmatpush1.bf16.msra.mxu0 0
        %1357 = vmatprep.subr.bf16.mxu0 0
        %1358 = vmatpush1.bf16.msra.mxu0 0
        %1359 = vmatprep.subr.bf16.mxu0 0
        %1360 = vmatpush1.bf16.msra.mxu0 0
        %1361 = vmatprep.subr.bf16.mxu0 0
        %1362 = vmatpush1.bf16.msra.mxu0 0
        %1363 = vmatprep.subr.bf16.mxu0 0
        %1364 = vmatpush1.bf16.msra.mxu0 0
        %1365 = vmatprep.subr.bf16.mxu0 %v888
        %1366 = vmatpush1.bf16.msra.mxu0 %v887
        %1367 = vmatprep.subr.bf16.mxu0 0
        %1368 = vmatpush2.bf16.msra.mxu0 0
        %1369 = vmatprep.subr.bf16.mxu0 0
        %1370 = vmatpush2.bf16.msra.mxu0 0
        %1371 = vmatprep.subr.bf16.mxu0 0
        %1372 = vmatpush2.bf16.msra.mxu0 0
        %1373 = vmatprep.subr.bf16.mxu0 0
        %1374 = vmatpush2.bf16.msra.mxu0 0
        %1375 = vmatprep.subr.bf16.mxu0 0
        %1376 = vmatpush2.bf16.msra.mxu0 0
        %1377 = vmatprep.subr.bf16.mxu0 0
        %1378 = vmatpush2.bf16.msra.mxu0 0
        %1379 = vmatprep.subr.bf16.mxu0 0
        %1380 = vmatpush2.bf16.msra.mxu0 0
        %1381 = vmatprep.subr.bf16.mxu0 0
        %1382 = vmatpush2.bf16.msra.mxu0 0
        %1383 = vmatprep.mubr.bf16.mxu0 0
        %1384 = vmatmul.mubr.bf16.gmra.mxu0 %v989
        %v1385 = vpop.f32.mrf.mxu0
        %v1386 = vadd.f32 %v1273, %v1385
        %v1387 = vpop.f32.mrf.mxu0
        %v1388 = vadd.f32 %v1275, %v1387
        %v1389 = vpop.f32.mrf.mxu0
        %v1390 = vadd.f32 %v1277, %v1389
        %v1391 = vpop.f32.mrf.mxu0
        %v1392 = vadd.f32 %v1279, %v1391
        %1393 = vmatprep.mubr.bf16.mxu0 0
        %1394 = vmatmul.mubr.bf16.gmra.mxu0 %v992
        %v1395 = vpop.f32.mrf.mxu0
        %v1396 = vadd.f32 %v1283, %v1395
        %v1397 = vpop.f32.mrf.mxu0
        %v1398 = vadd.f32 %v1285, %v1397
        %v1399 = vpop.f32.mrf.mxu0
        %v1400 = vadd.f32 %v1287, %v1399
        %v1401 = vpop.f32.mrf.mxu0
        %v1402 = vadd.f32 %v1289, %v1401
        %1403 = vmatprep.mubr.bf16.mxu0 0
        %1404 = vmatmul.mubr.bf16.gmra.mxu0 %v995
        %v1405 = vpop.f32.mrf.mxu0
        %v1406 = vadd.f32 %v1293, %v1405
        %v1407 = vpop.f32.mrf.mxu0
        %v1408 = vadd.f32 %v1295, %v1407
        %v1409 = vpop.f32.mrf.mxu0
        %v1410 = vadd.f32 %v1297, %v1409
        %v1411 = vpop.f32.mrf.mxu0
        %v1412 = vadd.f32 %v1299, %v1411
        %1413 = vmatprep.mubr.bf16.mxu0 0
        %1414 = vmatmul.mubr.bf16.gmra.mxu0 %v998
        %v1415 = vpop.f32.mrf.mxu0
        %v1416 = vadd.f32 %v1303, %v1415
        %v1417 = vpop.f32.mrf.mxu0
        %v1418 = vadd.f32 %v1305, %v1417
        %v1419 = vpop.f32.mrf.mxu0
        %v1420 = vadd.f32 %v1307, %v1419
        %v1421 = vpop.f32.mrf.mxu0
        %v1422 = vadd.f32 %v1309, %v1421
        %1423 = vmatprep.mubr.bf16.mxu0 0
        %1424 = vmatmul.mubr.bf16.gmra.mxu0 %v1001
        %v1425 = vpop.f32.mrf.mxu0
        %v1426 = vadd.f32 %v1313, %v1425
        %v1427 = vpop.f32.mrf.mxu0
        %v1428 = vadd.f32 %v1315, %v1427
        %v1429 = vpop.f32.mrf.mxu0
        %v1430 = vadd.f32 %v1317, %v1429
        %v1431 = vpop.f32.mrf.mxu0
        %v1432 = vadd.f32 %v1319, %v1431
        %1433 = vmatprep.mubr.bf16.mxu0 0
        %1434 = vmatmul.mubr.bf16.gmra.mxu0 %v1004
        %v1435 = vpop.f32.mrf.mxu0
        %v1436 = vadd.f32 %v1323, %v1435
        %v1437 = vpop.f32.mrf.mxu0
        %v1438 = vadd.f32 %v1325, %v1437
        %v1439 = vpop.f32.mrf.mxu0
        %v1440 = vadd.f32 %v1327, %v1439
        %v1441 = vpop.f32.mrf.mxu0
        %v1442 = vadd.f32 %v1329, %v1441
        %1443 = vmatprep.mubr.bf16.mxu0 0
        %1444 = vmatmul.mubr.bf16.gmra.mxu0 %v1007
        %v1445 = vpop.f32.mrf.mxu0
        %v1446 = vadd.f32 %v1333, %v1445
        %v1447 = vpop.f32.mrf.mxu0
        %v1448 = vadd.f32 %v1335, %v1447
        %v1449 = vpop.f32.mrf.mxu0
        %v1450 = vadd.f32 %v1337, %v1449
        %v1451 = vpop.f32.mrf.mxu0
        %v1452 = vadd.f32 %v1339, %v1451
        %1453 = vmatprep.mubr.bf16.mxu0 0
        %1454 = vmatmul.mubr.bf16.gmra.mxu0 %v1010
        %v1455 = vpop.f32.mrf.mxu0
        %v1456 = vadd.f32 %v1343, %v1455
        %v1457 = vpop.f32.mrf.mxu0
        %v1458 = vadd.f32 %v1345, %v1457
        %v1459 = vpop.f32.mrf.mxu0
        %v1460 = vadd.f32 %v1347, %v1459
        %v1461 = vpop.f32.mrf.mxu0
        %v1462 = vadd.f32 %v1349, %v1461
        %1463 = vdwg.mxu0
        %vm1464 = vcmp.gt.f32.partialorder %v1386, 0.0
        %vm1465 = vcmp.gt.f32.partialorder %v1388, 0.0
        %vm1466 = vcmp.gt.f32.partialorder %v1390, 0.0
        %vm1467 = vcmp.gt.f32.partialorder %v1392, 0.0
        %vm1468 = vcmp.gt.f32.partialorder %v1396, 0.0
        %vm1469 = vcmp.gt.f32.partialorder %v1398, 0.0
        %vm1470 = vcmp.gt.f32.partialorder %v1400, 0.0
        %vm1471 = vcmp.gt.f32.partialorder %v1402, 0.0
        %vm1472 = vcmp.gt.f32.partialorder %v1406, 0.0
        %vm1473 = vcmp.gt.f32.partialorder %v1408, 0.0
        %vm1474 = vcmp.gt.f32.partialorder %v1410, 0.0
        %vm1475 = vcmp.gt.f32.partialorder %v1412, 0.0
        %vm1476 = vcmp.gt.f32.partialorder %v1416, 0.0
        %vm1477 = vcmp.gt.f32.partialorder %v1418, 0.0
        %vm1478 = vcmp.gt.f32.partialorder %v1420, 0.0
        %vm1479 = vcmp.gt.f32.partialorder %v1422, 0.0
        %vm1480 = vcmp.gt.f32.partialorder %v1426, 0.0
        %vm1481 = vcmp.gt.f32.partialorder %v1428, 0.0
        %vm1482 = vcmp.gt.f32.partialorder %v1430, 0.0
        %vm1483 = vcmp.gt.f32.partialorder %v1432, 0.0
        %vm1484 = vcmp.gt.f32.partialorder %v1436, 0.0
        %vm1485 = vcmp.gt.f32.partialorder %v1438, 0.0
        %vm1486 = vcmp.gt.f32.partialorder %v1440, 0.0
        %vm1487 = vcmp.gt.f32.partialorder %v1442, 0.0
        %vm1488 = vcmp.gt.f32.partialorder %v1446, 0.0
        %vm1489 = vcmp.gt.f32.partialorder %v1448, 0.0
        %vm1490 = vcmp.gt.f32.partialorder %v1450, 0.0
        %vm1491 = vcmp.gt.f32.partialorder %v1452, 0.0
        %vm1492 = vcmp.gt.f32.partialorder %v1456, 0.0
        %vm1493 = vcmp.gt.f32.partialorder %v1458, 0.0
        %vm1494 = vcmp.gt.f32.partialorder %v1460, 0.0
        %vm1495 = vcmp.gt.f32.partialorder %v1462, 0.0
        %v1496 = vmul.f32 %v1386, 0.02
        %v1497 = vmul.f32 %v1388, 0.02
        %v1498 = vmul.f32 %v1390, 0.02
        %v1499 = vmul.f32 %v1392, 0.02
        %v1500 = vmul.f32 %v1396, 0.02
        %v1501 = vmul.f32 %v1398, 0.02
        %v1502 = vmul.f32 %v1400, 0.02
        %v1503 = vmul.f32 %v1402, 0.02
        %v1504 = vmul.f32 %v1406, 0.02
        %v1505 = vmul.f32 %v1408, 0.02
        %v1506 = vmul.f32 %v1410, 0.02
        %v1507 = vmul.f32 %v1412, 0.02
        %v1508 = vmul.f32 %v1416, 0.02
        %v1509 = vmul.f32 %v1418, 0.02
        %v1510 = vmul.f32 %v1420, 0.02
        %v1511 = vmul.f32 %v1422, 0.02
        %v1512 = vmul.f32 %v1426, 0.02
        %v1513 = vmul.f32 %v1428, 0.02
        %v1514 = vmul.f32 %v1430, 0.02
        %v1515 = vmul.f32 %v1432, 0.02
        %v1516 = vmul.f32 %v1436, 0.02
        %v1517 = vmul.f32 %v1438, 0.02
        %v1518 = vmul.f32 %v1440, 0.02
        %v1519 = vmul.f32 %v1442, 0.02
        %v1520 = vmul.f32 %v1446, 0.02
        %v1521 = vmul.f32 %v1448, 0.02
        %v1522 = vmul.f32 %v1450, 0.02
        %v1523 = vmul.f32 %v1452, 0.02
        %v1524 = vmul.f32 %v1456, 0.02
        %v1525 = vmul.f32 %v1458, 0.02
        %v1526 = vmul.f32 %v1460, 0.02
        %v1527 = vmul.f32 %v1462, 0.02
        %v1528 = vsel %vm1464, %v1386, %v1496
        %v1529 = vsel %vm1465, %v1388, %v1497
        %v1530 = vsel %vm1466, %v1390, %v1498
        %v1531 = vsel %vm1467, %v1392, %v1499
        %v1532 = vsel %vm1468, %v1396, %v1500
        %v1533 = vsel %vm1469, %v1398, %v1501
        %v1534 = vsel %vm1470, %v1400, %v1502
        %v1535 = vsel %vm1471, %v1402, %v1503
        %v1536 = vsel %vm1472, %v1406, %v1504
        %v1537 = vsel %vm1473, %v1408, %v1505
        %v1538 = vsel %vm1474, %v1410, %v1506
        %v1539 = vsel %vm1475, %v1412, %v1507
        %v1540 = vsel %vm1476, %v1416, %v1508
        %v1541 = vsel %vm1477, %v1418, %v1509
        %v1542 = vsel %vm1478, %v1420, %v1510
        %v1543 = vsel %vm1479, %v1422, %v1511
        %v1544 = vsel %vm1480, %v1426, %v1512
        %v1545 = vsel %vm1481, %v1428, %v1513
        %v1546 = vsel %vm1482, %v1430, %v1514
        %v1547 = vsel %vm1483, %v1432, %v1515
        %v1548 = vsel %vm1484, %v1436, %v1516
        %v1549 = vsel %vm1485, %v1438, %v1517
        %v1550 = vsel %vm1486, %v1440, %v1518
        %v1551 = vsel %vm1487, %v1442, %v1519
        %v1552 = vsel %vm1488, %v1446, %v1520
        %v1553 = vsel %vm1489, %v1448, %v1521
        %v1554 = vsel %vm1490, %v1450, %v1522
        %v1555 = vsel %vm1491, %v1452, %v1523
        %v1556 = vsel %vm1492, %v1456, %v1524
        %v1557 = vsel %vm1493, %v1458, %v1525
        %v1558 = vsel %vm1494, %v1460, %v1526
        %v1559 = vsel %vm1495, %v1462, %v1527
        %v1560 = vadd.f32 %v1528, %v1529
        %1561 = vadd.xlane.f32.xlu0 %v1560
        %v1562 = vpop.xlane.xlu0 %1561
        %v1563 = vadd.f32 %v1530, %v1531
        %1564 = vadd.xlane.f32.xlu0 %v1563
        %v1565 = vpop.xlane.xlu0 %1564
        %v1566 = vadd.f32 %v1532, %v1533
        %1567 = vadd.xlane.f32.xlu0 %v1566
        %v1568 = vpop.xlane.xlu0 %1567
        %v1569 = vadd.f32 %v1534, %v1535
        %1570 = vadd.xlane.f32.xlu0 %v1569
        %v1571 = vpop.xlane.xlu0 %1570
        %v1572 = vadd.f32 %v1536, %v1537
        %1573 = vadd.xlane.f32.xlu0 %v1572
        %v1574 = vpop.xlane.xlu0 %1573
        %v1575 = vadd.f32 %v1538, %v1539
        %1576 = vadd.xlane.f32.xlu0 %v1575
        %v1577 = vpop.xlane.xlu0 %1576
        %v1578 = vadd.f32 %v1540, %v1541
        %1579 = vadd.xlane.f32.xlu0 %v1578
        %v1580 = vpop.xlane.xlu0 %1579
        %v1581 = vadd.f32 %v1542, %v1543
        %1582 = vadd.xlane.f32.xlu0 %v1581
        %v1583 = vpop.xlane.xlu0 %1582
        %v1584 = vadd.f32 %v1544, %v1545
        %1585 = vadd.xlane.f32.xlu0 %v1584
        %v1586 = vpop.xlane.xlu0 %1585
        %v1587 = vadd.f32 %v1546, %v1547
        %1588 = vadd.xlane.f32.xlu0 %v1587
        %v1589 = vpop.xlane.xlu0 %1588
        %v1590 = vadd.f32 %v1548, %v1549
        %1591 = vadd.xlane.f32.xlu0 %v1590
        %v1592 = vpop.xlane.xlu0 %1591
        %v1593 = vadd.f32 %v1550, %v1551
        %1594 = vadd.xlane.f32.xlu0 %v1593
        %v1595 = vpop.xlane.xlu0 %1594
        %v1596 = vadd.f32 %v1552, %v1553
        %1597 = vadd.xlane.f32.xlu0 %v1596
        %v1598 = vpop.xlane.xlu0 %1597
        %v1599 = vadd.f32 %v1554, %v1555
        %1600 = vadd.xlane.f32.xlu0 %v1599
        %v1601 = vpop.xlane.xlu0 %1600
        %v1602 = vadd.f32 %v1556, %v1557
        %1603 = vadd.xlane.f32.xlu0 %v1602
        %v1604 = vpop.xlane.xlu0 %1603
        %v1605 = vadd.f32 %v1558, %v1559
        %1606 = vadd.xlane.f32.xlu0 %v1605
        %v1607 = vpop.xlane.xlu0 %1606
        %v1608 = vmul.f32 %v1528, %v1528
        %v1609 = vmul.f32 %v1529, %v1529
        %v1610 = vmul.f32 %v1530, %v1530
        %v1611 = vmul.f32 %v1531, %v1531
        %v1612 = vmul.f32 %v1532, %v1532
        %v1613 = vmul.f32 %v1533, %v1533
        %v1614 = vmul.f32 %v1534, %v1534
        %v1615 = vmul.f32 %v1535, %v1535
        %v1616 = vmul.f32 %v1536, %v1536
        %v1617 = vmul.f32 %v1537, %v1537
        %v1618 = vmul.f32 %v1538, %v1538
        %v1619 = vmul.f32 %v1539, %v1539
        %v1620 = vmul.f32 %v1540, %v1540
        %v1621 = vmul.f32 %v1541, %v1541
        %v1622 = vmul.f32 %v1542, %v1542
        %v1623 = vmul.f32 %v1543, %v1543
        %v1624 = vmul.f32 %v1544, %v1544
        %v1625 = vmul.f32 %v1545, %v1545
        %v1626 = vmul.f32 %v1546, %v1546
        %v1627 = vmul.f32 %v1547, %v1547
        %v1628 = vmul.f32 %v1548, %v1548
        %v1629 = vmul.f32 %v1549, %v1549
        %v1630 = vmul.f32 %v1550, %v1550
        %v1631 = vmul.f32 %v1551, %v1551
        %v1632 = vmul.f32 %v1552, %v1552
        %v1633 = vmul.f32 %v1553, %v1553
        %v1634 = vmul.f32 %v1554, %v1554
        %v1635 = vmul.f32 %v1555, %v1555
        %v1636 = vmul.f32 %v1556, %v1556
        %v1637 = vmul.f32 %v1557, %v1557
        %v1638 = vmul.f32 %v1558, %v1558
        %v1639 = vmul.f32 %v1559, %v1559
        %v1640 = vadd.f32 %v1608, %v1609
        %1641 = vadd.xlane.f32.xlu0 %v1640
        %v1642 = vpop.xlane.xlu0 %1641
        %v1643 = vadd.f32 %v1610, %v1611
        %1644 = vadd.xlane.f32.xlu0 %v1643
        %v1645 = vpop.xlane.xlu0 %1644
        %v1646 = vadd.f32 %v1612, %v1613
        %1647 = vadd.xlane.f32.xlu0 %v1646
        %v1648 = vpop.xlane.xlu0 %1647
        %v1649 = vadd.f32 %v1614, %v1615
        %1650 = vadd.xlane.f32.xlu0 %v1649
        %v1651 = vpop.xlane.xlu0 %1650
        %v1652 = vadd.f32 %v1616, %v1617
        %1653 = vadd.xlane.f32.xlu0 %v1652
        %v1654 = vpop.xlane.xlu0 %1653
        %v1655 = vadd.f32 %v1618, %v1619
        %1656 = vadd.xlane.f32.xlu0 %v1655
        %v1657 = vpop.xlane.xlu0 %1656
        %v1658 = vadd.f32 %v1620, %v1621
        %1659 = vadd.xlane.f32.xlu0 %v1658
        %v1660 = vpop.xlane.xlu0 %1659
        %v1661 = vadd.f32 %v1622, %v1623
        %1662 = vadd.xlane.f32.xlu0 %v1661
        %v1663 = vpop.xlane.xlu0 %1662
        %v1664 = vadd.f32 %v1624, %v1625
        %1665 = vadd.xlane.f32.xlu0 %v1664
        %v1666 = vpop.xlane.xlu0 %1665
        %v1667 = vadd.f32 %v1626, %v1627
        %1668 = vadd.xlane.f32.xlu0 %v1667
        %v1669 = vpop.xlane.xlu0 %1668
        %v1670 = vadd.f32 %v1628, %v1629
        %1671 = vadd.xlane.f32.xlu0 %v1670
        %v1672 = vpop.xlane.xlu0 %1671
        %v1673 = vadd.f32 %v1630, %v1631
        %1674 = vadd.xlane.f32.xlu0 %v1673
        %v1675 = vpop.xlane.xlu0 %1674
        %v1676 = vadd.f32 %v1632, %v1633
        %1677 = vadd.xlane.f32.xlu0 %v1676
        %v1678 = vpop.xlane.xlu0 %1677
        %v1679 = vadd.f32 %v1634, %v1635
        %1680 = vadd.xlane.f32.xlu0 %v1679
        %v1681 = vpop.xlane.xlu0 %1680
        %v1682 = vadd.f32 %v1636, %v1637
        %1683 = vadd.xlane.f32.xlu0 %v1682
        %v1684 = vpop.xlane.xlu0 %1683
        %v1685 = vadd.f32 %v1638, %v1639
        %1686 = vadd.xlane.f32.xlu0 %v1685
        %v1687 = vpop.xlane.xlu0 %1686
        %v1688 = vmul.f32 %v1562, 0.005
        %v1689 = vmul.f32 %v1565, 0.005
        %v1690 = vmul.f32 %v1568, 0.005
        %v1691 = vmul.f32 %v1571, 0.005
        %v1692 = vmul.f32 %v1574, 0.005
        %v1693 = vmul.f32 %v1577, 0.005
        %v1694 = vmul.f32 %v1580, 0.005
        %v1695 = vmul.f32 %v1583, 0.005
        %v1696 = vmul.f32 %v1586, 0.005
        %v1697 = vmul.f32 %v1589, 0.005
        %v1698 = vmul.f32 %v1592, 0.005
        %v1699 = vmul.f32 %v1595, 0.005
        %v1700 = vmul.f32 %v1598, 0.005
        %v1701 = vmul.f32 %v1601, 0.005
        %v1702 = vmul.f32 %v1604, 0.005
        %v1703 = vmul.f32 %v1607, 0.005
        %v1704 = vmul.f32 %v1642, 0.005
        %v1705 = vmul.f32 %v1645, 0.005
        %v1706 = vmul.f32 %v1648, 0.005
        %v1707 = vmul.f32 %v1651, 0.005
        %v1708 = vmul.f32 %v1654, 0.005
        %v1709 = vmul.f32 %v1657, 0.005
        %v1710 = vmul.f32 %v1660, 0.005
        %v1711 = vmul.f32 %v1663, 0.005
        %v1712 = vmul.f32 %v1666, 0.005
        %v1713 = vmul.f32 %v1669, 0.005
        %v1714 = vmul.f32 %v1672, 0.005
        %v1715 = vmul.f32 %v1675, 0.005
        %v1716 = vmul.f32 %v1678, 0.005
        %v1717 = vmul.f32 %v1681, 0.005
        %v1718 = vmul.f32 %v1684, 0.005
        %v1719 = vmul.f32 %v1687, 0.005
        %v1720 = vmul.f32 %v1688, %v1688
        %v1721 = vmul.f32 %v1689, %v1689
        %v1722 = vmul.f32 %v1690, %v1690
        %v1723 = vmul.f32 %v1691, %v1691
        %v1724 = vmul.f32 %v1692, %v1692
        %v1725 = vmul.f32 %v1693, %v1693
        %v1726 = vmul.f32 %v1694, %v1694
        %v1727 = vmul.f32 %v1695, %v1695
        %v1728 = vmul.f32 %v1696, %v1696
        %v1729 = vmul.f32 %v1697, %v1697
        %v1730 = vmul.f32 %v1698, %v1698
        %v1731 = vmul.f32 %v1699, %v1699
        %v1732 = vmul.f32 %v1700, %v1700
        %v1733 = vmul.f32 %v1701, %v1701
        %v1734 = vmul.f32 %v1702, %v1702
        %v1735 = vmul.f32 %v1703, %v1703
        %v1736 = vsub.f32 %v1704, %v1720
        %v1737 = vsub.f32 %v1705, %v1721
        %v1738 = vsub.f32 %v1706, %v1722
        %v1739 = vsub.f32 %v1707, %v1723
        %v1740 = vsub.f32 %v1708, %v1724
        %v1741 = vsub.f32 %v1709, %v1725
        %v1742 = vsub.f32 %v1710, %v1726
        %v1743 = vsub.f32 %v1711, %v1727
        %v1744 = vsub.f32 %v1712, %v1728
        %v1745 = vsub.f32 %v1713, %v1729
        %v1746 = vsub.f32 %v1714, %v1730
        %v1747 = vsub.f32 %v1715, %v1731
        %v1748 = vsub.f32 %v1716, %v1732
        %v1749 = vsub.f32 %v1717, %v1733
        %v1750 = vsub.f32 %v1718, %v1734
        %v1751 = vsub.f32 %v1719, %v1735
        %v1752 = vadd.f32 %v1736, 1e-05
        %v1753 = vadd.f32 %v1737, 1e-05
        %v1754 = vadd.f32 %v1738, 1e-05
        %v1755 = vadd.f32 %v1739, 1e-05
        %v1756 = vadd.f32 %v1740, 1e-05
        %v1757 = vadd.f32 %v1741, 1e-05
        %v1758 = vadd.f32 %v1742, 1e-05
        %v1759 = vadd.f32 %v1743, 1e-05
        %v1760 = vadd.f32 %v1744, 1e-05
        %v1761 = vadd.f32 %v1745, 1e-05
        %v1762 = vadd.f32 %v1746, 1e-05
        %v1763 = vadd.f32 %v1747, 1e-05
        %v1764 = vadd.f32 %v1748, 1e-05
        %v1765 = vadd.f32 %v1749, 1e-05
        %v1766 = vadd.f32 %v1750, 1e-05
        %v1767 = vadd.f32 %v1751, 1e-05
        %v1768 = vrsqrt.pop %v1752
        %v1769 = vrsqrt.pop %v1753
        %v1770 = vrsqrt.pop %v1754
        %v1771 = vrsqrt.pop %v1755
        %v1772 = vrsqrt.pop %v1756
        %v1773 = vrsqrt.pop %v1757
        %v1774 = vrsqrt.pop %v1758
        %v1775 = vrsqrt.pop %v1759
        %v1776 = vrsqrt.pop %v1760
        %v1777 = vrsqrt.pop %v1761
        %v1778 = vrsqrt.pop %v1762
        %v1779 = vrsqrt.pop %v1763
        %v1780 = vrsqrt.pop %v1764
        %v1781 = vrsqrt.pop %v1765
        %v1782 = vrsqrt.pop %v1766
        %v1783 = vrsqrt.pop %v1767
        %s1784 = scalar_lea.vmem %s2, 1
        %v1785 = vld [vmem:[%s1784] ss:$2 sm:$0x3]
        %v1787 = vlaneseq
        %v1788 = vshrl.u32 %v1787, 7
        %v1789 = vsub.s32 0, %v1788
        %v1790 = vrot.slane %v1785, %v1789
        %v1791 = vlaneseq
        %v1792 = vshrl.u32 %v1791, 7
        %v1793 = vsub.s32 1, %v1792
        %v1794 = vrot.slane %v1785, %v1793
        %v1797 = vmul.f32 %v1528, %v1790
        %v1798 = vmul.f32 %v1529, %v1794
        %v1799 = vmul.f32 %v1530, %v1790
        %v1800 = vmul.f32 %v1531, %v1794
        %v1801 = vmul.f32 %v1532, %v1790
        %v1802 = vmul.f32 %v1533, %v1794
        %v1803 = vmul.f32 %v1534, %v1790
        %v1804 = vmul.f32 %v1535, %v1794
        %v1805 = vmul.f32 %v1536, %v1790
        %v1806 = vmul.f32 %v1537, %v1794
        %v1807 = vmul.f32 %v1538, %v1790
        %v1808 = vmul.f32 %v1539, %v1794
        %v1809 = vmul.f32 %v1540, %v1790
        %v1810 = vmul.f32 %v1541, %v1794
        %v1811 = vmul.f32 %v1542, %v1790
        %v1812 = vmul.f32 %v1543, %v1794
        %v1813 = vmul.f32 %v1544, %v1790
        %v1814 = vmul.f32 %v1545, %v1794
        %v1815 = vmul.f32 %v1546, %v1790
        %v1816 = vmul.f32 %v1547, %v1794
        %v1817 = vmul.f32 %v1548, %v1790
        %v1818 = vmul.f32 %v1549, %v1794
        %v1819 = vmul.f32 %v1550, %v1790
        %v1820 = vmul.f32 %v1551, %v1794
        %v1821 = vmul.f32 %v1552, %v1790
        %v1822 = vmul.f32 %v1553, %v1794
        %v1823 = vmul.f32 %v1554, %v1790
        %v1824 = vmul.f32 %v1555, %v1794
        %v1825 = vmul.f32 %v1556, %v1790
        %v1826 = vmul.f32 %v1557, %v1794
        %v1827 = vmul.f32 %v1558, %v1790
        %v1828 = vmul.f32 %v1559, %v1794
        %v1829 = vadd.f32 %v1797, %v1798
        %1830 = vadd.xlane.f32.xlu0 %v1829
        %v1831 = vpop.xlane.xlu0 %1830
        %v1832 = vadd.f32 %v1799, %v1800
        %1833 = vadd.xlane.f32.xlu0 %v1832
        %v1834 = vpop.xlane.xlu0 %1833
        %v1835 = vadd.f32 %v1801, %v1802
        %1836 = vadd.xlane.f32.xlu0 %v1835
        %v1837 = vpop.xlane.xlu0 %1836
        %v1838 = vadd.f32 %v1803, %v1804
        %1839 = vadd.xlane.f32.xlu0 %v1838
        %v1840 = vpop.xlane.xlu0 %1839
        %v1841 = vadd.f32 %v1805, %v1806
        %1842 = vadd.xlane.f32.xlu0 %v1841
        %v1843 = vpop.xlane.xlu0 %1842
        %v1844 = vadd.f32 %v1807, %v1808
        %1845 = vadd.xlane.f32.xlu0 %v1844
        %v1846 = vpop.xlane.xlu0 %1845
        %v1847 = vadd.f32 %v1809, %v1810
        %1848 = vadd.xlane.f32.xlu0 %v1847
        %v1849 = vpop.xlane.xlu0 %1848
        %v1850 = vadd.f32 %v1811, %v1812
        %1851 = vadd.xlane.f32.xlu0 %v1850
        %v1852 = vpop.xlane.xlu0 %1851
        %v1853 = vadd.f32 %v1813, %v1814
        %1854 = vadd.xlane.f32.xlu0 %v1853
        %v1855 = vpop.xlane.xlu0 %1854
        %v1856 = vadd.f32 %v1815, %v1816
        %1857 = vadd.xlane.f32.xlu0 %v1856
        %v1858 = vpop.xlane.xlu0 %1857
        %v1859 = vadd.f32 %v1817, %v1818
        %1860 = vadd.xlane.f32.xlu0 %v1859
        %v1861 = vpop.xlane.xlu0 %1860
        %v1862 = vadd.f32 %v1819, %v1820
        %1863 = vadd.xlane.f32.xlu0 %v1862
        %v1864 = vpop.xlane.xlu0 %1863
        %v1865 = vadd.f32 %v1821, %v1822
        %1866 = vadd.xlane.f32.xlu0 %v1865
        %v1867 = vpop.xlane.xlu0 %1866
        %v1868 = vadd.f32 %v1823, %v1824
        %1869 = vadd.xlane.f32.xlu0 %v1868
        %v1870 = vpop.xlane.xlu0 %1869
        %v1871 = vadd.f32 %v1825, %v1826
        %1872 = vadd.xlane.f32.xlu0 %v1871
        %v1873 = vpop.xlane.xlu0 %1872
        %v1874 = vadd.f32 %v1827, %v1828
        %1875 = vadd.xlane.f32.xlu0 %v1874
        %v1876 = vpop.xlane.xlu0 %1875
        %s1877 = sld [smem:[#allocation2]]
        %v1878 = vstv %s1877
        %v1879 = vmul.f32 %v1688, %v1878
        %v1880 = vmul.f32 %v1689, %v1878
        %v1881 = vmul.f32 %v1690, %v1878
        %v1882 = vmul.f32 %v1691, %v1878
        %v1883 = vmul.f32 %v1692, %v1878
        %v1884 = vmul.f32 %v1693, %v1878
        %v1885 = vmul.f32 %v1694, %v1878
        %v1886 = vmul.f32 %v1695, %v1878
        %v1887 = vmul.f32 %v1696, %v1878
        %v1888 = vmul.f32 %v1697, %v1878
        %v1889 = vmul.f32 %v1698, %v1878
        %v1890 = vmul.f32 %v1699, %v1878
        %v1891 = vmul.f32 %v1700, %v1878
        %v1892 = vmul.f32 %v1701, %v1878
        %v1893 = vmul.f32 %v1702, %v1878
        %v1894 = vmul.f32 %v1703, %v1878
        %v1895 = vsub.f32 %v1831, %v1879
        %v1896 = vsub.f32 %v1834, %v1880
        %v1897 = vsub.f32 %v1837, %v1881
        %v1898 = vsub.f32 %v1840, %v1882
        %v1899 = vsub.f32 %v1843, %v1883
        %v1900 = vsub.f32 %v1846, %v1884
        %v1901 = vsub.f32 %v1849, %v1885
        %v1902 = vsub.f32 %v1852, %v1886
        %v1903 = vsub.f32 %v1855, %v1887
        %v1904 = vsub.f32 %v1858, %v1888
        %v1905 = vsub.f32 %v1861, %v1889
        %v1906 = vsub.f32 %v1864, %v1890
        %v1907 = vsub.f32 %v1867, %v1891
        %v1908 = vsub.f32 %v1870, %v1892
        %v1909 = vsub.f32 %v1873, %v1893
        %v1910 = vsub.f32 %v1876, %v1894
        %v1911 = vmul.f32 %v1768, %v1895
        %v1912 = vmul.f32 %v1769, %v1896
        %v1913 = vmul.f32 %v1770, %v1897
        %v1914 = vmul.f32 %v1771, %v1898
        %v1915 = vmul.f32 %v1772, %v1899
        %v1916 = vmul.f32 %v1773, %v1900
        %v1917 = vmul.f32 %v1774, %v1901
        %v1918 = vmul.f32 %v1775, %v1902
        %v1919 = vmul.f32 %v1776, %v1903
        %v1920 = vmul.f32 %v1777, %v1904
        %v1921 = vmul.f32 %v1778, %v1905
        %v1922 = vmul.f32 %v1779, %v1906
        %v1923 = vmul.f32 %v1780, %v1907
        %v1924 = vmul.f32 %v1781, %v1908
        %v1925 = vmul.f32 %v1782, %v1909
        %v1926 = vmul.f32 %v1783, %v1910
        %s1927 = sld [smem:[#allocation2 + $0x1]]
        %v1928 = vstv %s1927
        %v1929 = vadd.f32 %v1911, %v1928
        %v1930 = vadd.f32 %v1912, %v1928
        %v1931 = vadd.f32 %v1913, %v1928
        %v1932 = vadd.f32 %v1914, %v1928
        %v1933 = vadd.f32 %v1915, %v1928
        %v1934 = vadd.f32 %v1916, %v1928
        %v1935 = vadd.f32 %v1917, %v1928
        %v1936 = vadd.f32 %v1918, %v1928
        %v1937 = vadd.f32 %v1919, %v1928
        %v1938 = vadd.f32 %v1920, %v1928
        %v1939 = vadd.f32 %v1921, %v1928
        %v1940 = vadd.f32 %v1922, %v1928
        %v1941 = vadd.f32 %v1923, %v1928
        %v1942 = vadd.f32 %v1924, %v1928
        %v1943 = vadd.f32 %v1925, %v1928
        %v1944 = vadd.f32 %v1926, %v1928
        %v1945 = vxor.u32 %v1929, 2147483648
        %v1946 = vxor.u32 %v1930, 2147483648
        %v1947 = vxor.u32 %v1931, 2147483648
        %v1948 = vxor.u32 %v1932, 2147483648
        %v1949 = vxor.u32 %v1933, 2147483648
        %v1950 = vxor.u32 %v1934, 2147483648
        %v1951 = vxor.u32 %v1935, 2147483648
        %v1952 = vxor.u32 %v1936, 2147483648
        %v1953 = vxor.u32 %v1937, 2147483648
        %v1954 = vxor.u32 %v1938, 2147483648
        %v1955 = vxor.u32 %v1939, 2147483648
        %v1956 = vxor.u32 %v1940, 2147483648
        %v1957 = vxor.u32 %v1941, 2147483648
        %v1958 = vxor.u32 %v1942, 2147483648
        %v1959 = vxor.u32 %v1943, 2147483648
        %v1960 = vxor.u32 %v1944, 2147483648
        %v1961 = vmul.f32 %v1945, 1.442695
        %v1962 = vpow.pop %v1961
        %v1963 = vmul.f32 %v1946, 1.442695
        %v1964 = vpow.pop %v1963
        %v1965 = vmul.f32 %v1947, 1.442695
        %v1966 = vpow.pop %v1965
        %v1967 = vmul.f32 %v1948, 1.442695
        %v1968 = vpow.pop %v1967
        %v1969 = vmul.f32 %v1949, 1.442695
        %v1970 = vpow.pop %v1969
        %v1971 = vmul.f32 %v1950, 1.442695
        %v1972 = vpow.pop %v1971
        %v1973 = vmul.f32 %v1951, 1.442695
        %v1974 = vpow.pop %v1973
        %v1975 = vmul.f32 %v1952, 1.442695
        %v1976 = vpow.pop %v1975
        %v1977 = vmul.f32 %v1953, 1.442695
        %v1978 = vpow.pop %v1977
        %v1979 = vmul.f32 %v1954, 1.442695
        %v1980 = vpow.pop %v1979
        %v1981 = vmul.f32 %v1955, 1.442695
        %v1982 = vpow.pop %v1981
        %v1983 = vmul.f32 %v1956, 1.442695
        %v1984 = vpow.pop %v1983
        %v1985 = vmul.f32 %v1957, 1.442695
        %v1986 = vpow.pop %v1985
        %v1987 = vmul.f32 %v1958, 1.442695
        %v1988 = vpow.pop %v1987
        %v1989 = vmul.f32 %v1959, 1.442695
        %v1990 = vpow.pop %v1989
        %v1991 = vmul.f32 %v1960, 1.442695
        %v1992 = vpow.pop %v1991
        %v1993 = vadd.f32 %v1962, 1.0
        %v1994 = vadd.f32 %v1964, 1.0
        %v1995 = vadd.f32 %v1966, 1.0
        %v1996 = vadd.f32 %v1968, 1.0
        %v1997 = vadd.f32 %v1970, 1.0
        %v1998 = vadd.f32 %v1972, 1.0
        %v1999 = vadd.f32 %v1974, 1.0
        %v2000 = vadd.f32 %v1976, 1.0
        %v2001 = vadd.f32 %v1978, 1.0
        %v2002 = vadd.f32 %v1980, 1.0
        %v2003 = vadd.f32 %v1982, 1.0
        %v2004 = vadd.f32 %v1984, 1.0
        %v2005 = vadd.f32 %v1986, 1.0
        %v2006 = vadd.f32 %v1988, 1.0
        %v2007 = vadd.f32 %v1990, 1.0
        %v2008 = vadd.f32 %v1992, 1.0
        %v2009 = vrcp.pop %v1993
        %v2010 = vmul.f32 1.0, %v2009
        %v2011 = vrcp.pop %v1994
        %v2012 = vmul.f32 1.0, %v2011
        %v2013 = vrcp.pop %v1995
        %v2014 = vmul.f32 1.0, %v2013
        %v2015 = vrcp.pop %v1996
        %v2016 = vmul.f32 1.0, %v2015
        %v2017 = vrcp.pop %v1997
        %v2018 = vmul.f32 1.0, %v2017
        %v2019 = vrcp.pop %v1998
        %v2020 = vmul.f32 1.0, %v2019
        %v2021 = vrcp.pop %v1999
        %v2022 = vmul.f32 1.0, %v2021
        %v2023 = vrcp.pop %v2000
        %v2024 = vmul.f32 1.0, %v2023
        %v2025 = vrcp.pop %v2001
        %v2026 = vmul.f32 1.0, %v2025
        %v2027 = vrcp.pop %v2002
        %v2028 = vmul.f32 1.0, %v2027
        %v2029 = vrcp.pop %v2003
        %v2030 = vmul.f32 1.0, %v2029
        %v2031 = vrcp.pop %v2004
        %v2032 = vmul.f32 1.0, %v2031
        %v2033 = vrcp.pop %v2005
        %v2034 = vmul.f32 1.0, %v2033
        %v2035 = vrcp.pop %v2006
        %v2036 = vmul.f32 1.0, %v2035
        %v2037 = vrcp.pop %v2007
        %v2038 = vmul.f32 1.0, %v2037
        %v2039 = vrcp.pop %v2008
        %v2040 = vmul.f32 1.0, %v2039
        %vm2041 = vcmask 7168
        %2042 = vst.msk [vmem:[%s216] sm:$0xff] %vm2041, %v2010
        %2043 = vst.msk [vmem:[%s216 + $0x8] sm:$0xff] %vm2041, %v2012
        %2044 = vst.msk [vmem:[%s216 + $0x10] sm:$0xff] %vm2041, %v2014
        %2045 = vst.msk [vmem:[%s216 + $0x18] sm:$0xff] %vm2041, %v2016
        %2046 = vst.msk [vmem:[%s216 + $0x20] sm:$0xff] %vm2041, %v2018
        %2047 = vst.msk [vmem:[%s216 + $0x28] sm:$0xff] %vm2041, %v2020
        %2048 = vst.msk [vmem:[%s216 + $0x30] sm:$0xff] %vm2041, %v2022
        %2049 = vst.msk [vmem:[%s216 + $0x38] sm:$0xff] %vm2041, %v2024
        %2050 = vst.msk [vmem:[%s216 + $0x40] sm:$0xff] %vm2041, %v2026
        %2051 = vst.msk [vmem:[%s216 + $0x48] sm:$0xff] %vm2041, %v2028
        %2052 = vst.msk [vmem:[%s216 + $0x50] sm:$0xff] %vm2041, %v2030
        %2053 = vst.msk [vmem:[%s216 + $0x58] sm:$0xff] %vm2041, %v2032
        %2054 = vst.msk [vmem:[%s216 + $0x60] sm:$0xff] %vm2041, %v2034
        %2055 = vst.msk [vmem:[%s216 + $0x68] sm:$0xff] %vm2041, %v2036
        %2056 = vst.msk [vmem:[%s216 + $0x70] sm:$0xff] %vm2041, %v2038
        %2057 = vst.msk [vmem:[%s216 + $0x78] sm:$0xff] %vm2041, %v2040
        %s2058 = smul.u32 16, %s16
        %p2059 = scmp.lt.s32.totalorder %s2058, 31
        %s2060 = scalar_select %p2059, %s2058, 31
        %s2061 = smul.addr %s2060, 8
        %s2062 = scalar_lea.vmem %s4, %s2061
        // Predicated region
        $region41: #{tpu_custom_call.1} parent=35 // pred_check
          %p2063 = pneg %p123
        $region42: #{tpu_custom_call.1} parent=35 // pred_check_branch
          %2065 = sbr.rel (%p2063) target = $region44
        $region43: #{tpu_custom_call.1} parent=35 // pred_region
          %s2066 = smul.u32 16, %s16
        $region44: #{tpu_custom_call.1} parent=35 // pred_fallthru
          _
      $region36: #{tpu_custom_call.1} parent=5 // pred_fallthru
        _
      %p2067 = scmp.le.s32.totalorder 2, %s11
      // Predicated region
      $region45: #{tpu_custom_call.1} parent=5 // pred_check
        %p2068 = pneg %p2067
      $region46: #{tpu_custom_call.1} parent=5 // pred_check_branch
        %2070 = sbr.rel (%p2068) target = $region48
      $region47: #{tpu_custom_call.1} parent=5 // pred_region
        %s2071 = ssub.s32 %s11, 2
        // Predicated region
        $region49: #{tpu_custom_call.1} parent=47 // pred_check
          %p2072 = pneg %p129
        $region50: #{tpu_custom_call.1} parent=47 // pred_check_branch
          %2074 = sbr.rel (%p2072) target = $region52
        $region51: #{tpu_custom_call.1} parent=47 // pred_region
          %s2075 = smul.u32 16, %s17
          %p2076 = scmp.lt.s32.totalorder %s2075, 31
          %s2077 = scalar_select %p2076, %s2075, 31
          %s2078 = smul.addr %s2077, 8
          %s2079 = scalar_lea.vmem %s4, %s2078
        $region52: #{tpu_custom_call.1} parent=47 // pred_fallthru
          _
      $region48: #{tpu_custom_call.1} parent=5 // pred_fallthru
        _
    $region6: #{tpu_custom_call.1} parent=1 // loop_footer
      %s15 = sadd.s32 1, %s11
    $region7: #{tpu_custom_call.1} parent=1 // loop_footer_branch
      %10 = sbr.rel target = $region3
    $region8: #{tpu_custom_call.1} parent=1 // loop_exit
      _
    %2080 = vsyncpa [#allocation3], 1
    %s2081 = scalar_lea.sflag [#allocation3], 1
    %2082 = vsyncpa %s2081, 1

</llo_original>
